<compile_context>
chip_gen: v6e
topology: v6e:2x2x1
jax: 0.10.0
libtpu: 0.0.40
codegen_flags: <defaults>
</compile_context>

<pallas_src>
import jax
import jax.numpy as jnp
from jax.experimental import pallas as pl
from jax.experimental.pallas import tpu as pltpu


_MIB = 1024 * 1024
_VMEM_BUDGET = 36 * _MIB     # pipeline-buffer budget (fits v7x 64 MiB physical)
_VMEM_LIMIT_CAP = 48 * _MIB  # scoped-VMEM limit requested from the compiler
_TK = 2048                   # K-tile over D once W1/x no longer fit the budget


def _round_up(x, m):
    return ((x + m - 1) // m) * m


def base_head_kernel(x_ref, w1_ref, b1_ref, w2_ref, b2_ref, o_ref, h_acc):
    """One (batch-tile, K-tile) grid step of out = relu(x@W1 + b1) @ W2 + b2."""
    k = pl.program_id(1)

    @pl.when(k == 0)
    def _():
        h_acc[...] = jnp.zeros_like(h_acc)

    # base Linear: bf16 MXU operands (x cast in-kernel), f32 accumulation.
    h_acc[...] += jnp.dot(x_ref[...].astype(jnp.bfloat16), w1_ref[...],
                          preferred_element_type=jnp.float32)

    @pl.when(k == pl.num_programs(1) - 1)
    def _():
        h = jnp.maximum(h_acc[...] + b1_ref[...], 0.0)           # bias + ReLU (f32)
        # head Linear: re-cast activations to bf16 for the MXU, f32 accumulation.
        o = jnp.dot(h.astype(jnp.bfloat16), w2_ref[...],
                    preferred_element_type=jnp.float32)
        o_ref[...] = (o + b2_ref[...]).astype(o_ref.dtype)        # lane-dense store


def _vmem_bytes(tn, xk, h_pad, c_pad, k_tiles, single_buf_weights):
    """Rough pipeline-buffer VMEM estimate (bytes)."""
    w_bufs = 1 if single_buf_weights else 2
    w1_bufs = w_bufs if k_tiles == 1 else 2        # K-tiled W1 keeps double-buffering
    return (2 * tn * xk * 4                        # x tiles (f32, double-buffered)
            + 2 * tn * c_pad * 4                   # out tiles (f32, double-buffered)
            + tn * h_pad * 4                       # h accumulator scratch
            + w1_bufs * xk * h_pad * 2             # W1 (bf16)
            + w_bufs * h_pad * c_pad * 2           # W2 (bf16)
            + w_bufs * (h_pad + c_pad) * 4)        # biases (f32)


def _pad2d(a, shape, dtype):
    """Zero-pad a 2-D array to shape/dtype; returns `a` untouched if already conforming."""
    if a.shape == tuple(shape) and a.dtype == dtype:
        return a
    return jnp.zeros(shape, dtype).at[:a.shape[0], :a.shape[1]].set(a.astype(dtype))


def base_head_split(x, w1, b1, w2, b2, *, tn=512):
    """BaseHeadSplit forward: head(base(x)).

    x:  (N, ...) input, flattened to (N, D) like torch .view(N, -1)
    w1: (D, HID), b1: (HID,)   -- base Linear (weights stored as (in, out))
    w2: (HID, NC), b2: (NC,)   -- head Linear
    Returns (N, NC) f32.  MXU matmuls use bf16 operands with f32 accumulation.
    """
    N = x.shape[0]
    x2 = x.reshape(N, -1)                 # glue: flatten, plain JAX
    D = x2.shape[1]
    H = w1.shape[1]
    C = w2.shape[1]

    # Pad only the *small* operands to lane/MXU-friendly widths.
    H_pad = _round_up(H, 128)
    C_pad = _round_up(C, 128)

    # ---- Batch tile + (optional) K tile, chosen from the VMEM budget. ------
    TN = max(8, (min(max(tn, 8), _round_up(N, 8)) // 8) * 8)    # multiple of 8 (f32)
    k_tiles, xk = 1, D                    # xk = x / W1 block extent along D
    while _vmem_bytes(TN, xk, H_pad, C_pad, k_tiles, True) > _VMEM_BUDGET and TN > 256:
        TN = max(256, ((TN // 2) // 8) * 8)
    if _vmem_bytes(TN, xk, H_pad, C_pad, k_tiles, True) > _VMEM_BUDGET:
        # Large D: tile the reduction over D so VMEM use is bounded independent of D.
        k_tiles, xk = pl.cdiv(D, _TK), _TK
        while _vmem_bytes(TN, xk, H_pad, C_pad, k_tiles, True) > _VMEM_BUDGET and TN > 8:
            TN = max(8, ((TN // 2) // 8) * 8)
    # v7x: make sure the "parallel" batch axis has >= 2 tiles so both TCs get work.
    if N > 8 and _round_up(N, TN) // TN == 1:
        TN = _round_up(pl.cdiv(N, 2), 8)
    N_pad = _round_up(N, TN)
    D_pad = xk * k_tiles                  # == D unless K-tiling kicked in

    # ---- Operand prep (copies only where padding is actually required). ----
    x_p = _pad2d(x2, (N_pad, D_pad), x2.dtype)                 # usually x2 itself
    w1_p = _pad2d(w1, (D_pad, H_pad), jnp.bfloat16)
    w2_p = _pad2d(w2, (H_pad, C_pad), jnp.bfloat16)
    b1_p = _pad2d(b1.reshape(1, -1), (1, H_pad), jnp.float32)
    b2_p = _pad2d(b2.reshape(1, -1), (1, C_pad), jnp.float32)

    grid = (N_pad // TN, k_tiles)         # reduction (K) axis last
    flops = 2 * N_pad * D_pad * H_pad + 2 * N_pad * H_pad * C_pad
    bytes_accessed = (x_p.size * x_p.dtype.itemsize + w1_p.size * 2 + w2_p.size * 2
                      + (H_pad + C_pad) * 4 + N_pad * C_pad * 4)
    est = _vmem_bytes(TN, xk, H_pad, C_pad, k_tiles, True)
    vmem_limit = int(min(max(2 * est, 16 * _MIB), _VMEM_LIMIT_CAP))

    def make_call(single_buffer_weights):
        const = ({"pipeline_mode": pl.Buffered(1)} if single_buffer_weights else {})
        w1_mode = const if k_tiles == 1 else {}    # K-tiled W1 keeps double-buffering
        return pl.pallas_call(
            base_head_kernel,
            out_shape=jax.ShapeDtypeStruct((N_pad, C_pad), jnp.float32),
            grid=grid,
            in_specs=[
                pl.BlockSpec((TN, xk), lambda i, k: (i, k)),                  # x
                pl.BlockSpec((xk, H_pad), lambda i, k: (k, 0), **w1_mode),    # W1
                pl.BlockSpec((1, H_pad), lambda i, k: (0, 0), **const),       # b1
                pl.BlockSpec((H_pad, C_pad), lambda i, k: (0, 0), **const),   # W2
                pl.BlockSpec((1, C_pad), lambda i, k: (0, 0), **const),       # b2
            ],
            out_specs=pl.BlockSpec((TN, C_pad), lambda i, k: (i, 0)),
            scratch_shapes=[pltpu.VMEM((TN, H_pad), jnp.float32)],
            compiler_params=pltpu.CompilerParams(
                dimension_semantics=("parallel", "arbitrary"),
                vmem_limit_bytes=vmem_limit),
            cost_estimate=pl.CostEstimate(
                flops=flops, transcendentals=0, bytes_accessed=bytes_accessed),
        )

    try:
        out = make_call(True)(x_p, w1_p, b1_p, w2_p, b2_p)
    except Exception:
        # pipeline_mode=pl.Buffered(1) unsupported on this jax build -> default buffering.
        out = make_call(False)(x_p, w1_p, b1_p, w2_p, b2_p)

    # Skip the extra HBM pass when nothing was padded.
    if N_pad != N or C_pad != C:
        out = out[:N, :C]
    return out


if __name__ == "__main__":
    key = jax.random.PRNGKey(0)
    kx, kw1, kb1, kw2, kb2 = jax.random.split(key, 5)

    # Small shapes consistent with an image-classification forward pass.
    N, Cin, Himg, Wimg = 2, 4, 16, 16      # input images, NCHW
    D = Cin * Himg * Wimg                  # 1024 flattened features
    HID = 32                               # base hidden width
    NUM_CLASSES = 8                        # head output width

    x = jax.random.normal(kx, (N, Cin, Himg, Wimg), dtype=jnp.float32)

    # PyTorch Linear stores W as (out, in); the kernel uses the (in, out) layout.
    w1 = jax.random.normal(kw1, (D, HID), dtype=jnp.float32) * 0.02
    b1 = jax.random.normal(kb1, (HID,), dtype=jnp.float32) * 0.02
    w2 = jax.random.normal(kw2, (HID, NUM_CLASSES), dtype=jnp.float32) * 0.02
    b2 = jax.random.normal(kb2, (NUM_CLASSES,), dtype=jnp.float32) * 0.02

    out = base_head_split(x, w1, b1, w2, b2)
    out = jax.block_until_ready(out)

    # Pure-JAX f32 reference (bf16 MXU operands => looser tolerance).
    ref_h = jnp.maximum(x.reshape(N, -1) @ w1 + b1, 0.0)
    ref = ref_h @ w2 + b2
    assert out.shape == (N, NUM_CLASSES)
    assert jnp.allclose(out, ref, atol=1e-2, rtol=1e-2), float(
        jnp.max(jnp.abs(out - ref)))

    print("KERNEL_OK")
</pallas_src>

<mosaic_0001>
module attributes {stable_mosaic.version = 11 : i64} {
  func.func @base_head_kernel(%arg0: i32, %arg1: i32, %arg2: memref<8x1024xf32, #tpu.memory_space<vmem>>, %arg3: memref<1024x128xbf16, #tpu.memory_space<vmem>>, %arg4: memref<1x128xf32, #tpu.memory_space<vmem>>, %arg5: memref<128x128xbf16, #tpu.memory_space<vmem>>, %arg6: memref<1x128xf32, #tpu.memory_space<vmem>>, %arg7: memref<8x128xf32, #tpu.memory_space<vmem>>, %arg8: memref<8x128xf32, #tpu.memory_space<vmem>>) attributes {dimension_semantics = [#tpu.dimension_semantics<parallel>, #tpu.dimension_semantics<arbitrary>], iteration_bounds = array<i64: 1, 1>, scalar_prefetch = 0 : i64, scratch_operands = 1 : i64, tpu.core_type = #tpu.core_type<tc>, window_params = [{transform_indices = @transform_0, window_bounds = array<i64: 8, 1024>}, {pipeline_mode = #tpu.pipeline_mode<synchronous>, transform_indices = @transform_1, window_bounds = array<i64: 1024, 128>}, {pipeline_mode = #tpu.pipeline_mode<synchronous>, transform_indices = @transform_2, window_bounds = array<i64: 1, 128>}, {pipeline_mode = #tpu.pipeline_mode<synchronous>, transform_indices = @transform_3, window_bounds = array<i64: 128, 128>}, {pipeline_mode = #tpu.pipeline_mode<synchronous>, transform_indices = @transform_4, window_bounds = array<i64: 1, 128>}, {transform_indices = @transform_5, window_bounds = array<i64: 8, 128>}]} {
    %c0_i32 = arith.constant 0 : i32
    %0 = arith.cmpi eq, %arg1, %c0_i32 : i32
    %1 = arith.extui %0 : i1 to i32
    %c0_i32_0 = arith.constant 0 : i32
    %2 = arith.cmpi ne, %1, %c0_i32_0 : i32
    scf.if %2 {
      %cst_10 = arith.constant 0.000000e+00 : f32
      %13 = vector.broadcast %cst_10 : f32 to vector<8x128xf32>
      %c0_11 = arith.constant 0 : index
      %c0_12 = arith.constant 0 : index
      %14 = vector.load %arg8[%c0_11, %c0_12] : memref<8x128xf32, #tpu.memory_space<vmem>>, vector<8x128xf32>
      tpu.vector_store %arg8[%c0_11, %c0_12], %13 {strides = array<i32>} : memref<8x128xf32, #tpu.memory_space<vmem>>, vector<8x128xf32>,
    } else {
    }
    %c0 = arith.constant 0 : index
    %c0_1 = arith.constant 0 : index
    %3 = vector.load %arg8[%c0, %c0_1] : memref<8x128xf32, #tpu.memory_space<vmem>>, vector<8x128xf32>
    %c0_2 = arith.constant 0 : index
    %c0_3 = arith.constant 0 : index
    %4 = vector.load %arg2[%c0_2, %c0_3] : memref<8x1024xf32, #tpu.memory_space<vmem>>, vector<8x1024xf32>
    %5 = arith.truncf %4 : vector<8x1024xf32> to vector<8x1024xbf16>
    %c0_4 = arith.constant 0 : index
    %c0_5 = arith.constant 0 : index
    %6 = vector.load %arg3[%c0_4, %c0_5] : memref<1024x128xbf16, #tpu.memory_space<vmem>>, vector<1024x128xbf16>
    %cst = arith.constant dense<0.000000e+00> : vector<8x128xf32>
    %7 = tpu.matmul %5, %6, %cst {dimension_numbers = #tpu.dot_dimension_numbers<[1], [0], [0], [1], [0, 0, 1, 1], [], []>} : vector<8x1024xbf16>, vector<1024x128xbf16>, vector<8x128xf32> -> vector<8x128xf32>
    %8 = arith.addf %3, %7 : vector<8x128xf32>
    %c0_6 = arith.constant 0 : index
    %c0_7 = arith.constant 0 : index
    %9 = vector.load %arg8[%c0_6, %c0_7] : memref<8x128xf32, #tpu.memory_space<vmem>>, vector<8x128xf32>
    tpu.vector_store %arg8[%c0_6, %c0_7], %8 {strides = array<i32>} : memref<8x128xf32, #tpu.memory_space<vmem>>, vector<8x128xf32>,
    %c0_i32_8 = arith.constant 0 : i32
    %10 = arith.cmpi eq, %arg1, %c0_i32_8 : i32
    %11 = arith.extui %10 : i1 to i32
    %c0_i32_9 = arith.constant 0 : i32
    %12 = arith.cmpi ne, %11, %c0_i32_9 : i32
    scf.if %12 {
      %c0_10 = arith.constant 0 : index
      %c0_11 = arith.constant 0 : index
      %13 = vector.load %arg8[%c0_10, %c0_11] : memref<8x128xf32, #tpu.memory_space<vmem>>, vector<8x128xf32>
      %c0_12 = arith.constant 0 : index
      %c0_13 = arith.constant 0 : index
      %14 = vector.load %arg4[%c0_12, %c0_13] : memref<1x128xf32, #tpu.memory_space<vmem>>, vector<1x128xf32>
      %15 = vector.broadcast %14 : vector<1x128xf32> to vector<8x128xf32>
      %16 = arith.addf %13, %15 : vector<8x128xf32>
      %cst_14 = arith.constant 0.000000e+00 : f32
      %17 = vector.broadcast %cst_14 : f32 to vector<8x128xf32>
      %18 = arith.maximumf %16, %17 : vector<8x128xf32>
      %19 = arith.truncf %18 : vector<8x128xf32> to vector<8x128xbf16>
      %c0_15 = arith.constant 0 : index
      %c0_16 = arith.constant 0 : index
      %20 = vector.load %arg5[%c0_15, %c0_16] : memref<128x128xbf16, #tpu.memory_space<vmem>>, vector<128x128xbf16>
      %cst_17 = arith.constant dense<0.000000e+00> : vector<8x128xf32>
      %21 = tpu.matmul %19, %20, %cst_17 {dimension_numbers = #tpu.dot_dimension_numbers<[1], [0], [0], [1], [0, 0, 1, 1], [], []>} : vector<8x128xbf16>, vector<128x128xbf16>, vector<8x128xf32> -> vector<8x128xf32>
      %c0_18 = arith.constant 0 : index
      %c0_19 = arith.constant 0 : index
      %22 = vector.load %arg6[%c0_18, %c0_19] : memref<1x128xf32, #tpu.memory_space<vmem>>, vector<1x128xf32>
      %23 = vector.broadcast %22 : vector<1x128xf32> to vector<8x128xf32>
      %24 = arith.addf %21, %23 : vector<8x128xf32>
      %c0_20 = arith.constant 0 : index
      %c0_21 = arith.constant 0 : index
      %25 = vector.load %arg7[%c0_20, %c0_21] : memref<8x128xf32, #tpu.memory_space<vmem>>, vector<8x128xf32>
      tpu.vector_store %arg7[%c0_20, %c0_21], %24 {strides = array<i32>} : memref<8x128xf32, #tpu.memory_space<vmem>>, vector<8x128xf32>,
    } else {
    }
    return
  }
  func.func @transform_0(%arg0: i32, %arg1: i32) -> (i32, i32) {
    %c0_i32 = arith.constant 0 : i32
    return %arg0, %arg1 : i32, i32
  }
  func.func @transform_1(%arg0: i32, %arg1: i32) -> (i32, i32) {
    %c0_i32 = arith.constant 0 : i32
    %c0_i32_0 = arith.constant 0 : i32
    return %arg1, %c0_i32 : i32, i32
  }
  func.func @transform_2(%arg0: i32, %arg1: i32) -> (i32, i32) {
    %c0_i32 = arith.constant 0 : i32
    %c0_i32_0 = arith.constant 0 : i32
    %c0_i32_1 = arith.constant 0 : i32
    return %c0_i32, %c0_i32_0 : i32, i32
  }
  func.func @transform_3(%arg0: i32, %arg1: i32) -> (i32, i32) {
    %c0_i32 = arith.constant 0 : i32
    %c0_i32_0 = arith.constant 0 : i32
    %c0_i32_1 = arith.constant 0 : i32
    return %c0_i32, %c0_i32_0 : i32, i32
  }
  func.func @transform_4(%arg0: i32, %arg1: i32) -> (i32, i32) {
    %c0_i32 = arith.constant 0 : i32
    %c0_i32_0 = arith.constant 0 : i32
    %c0_i32_1 = arith.constant 0 : i32
    return %c0_i32, %c0_i32_0 : i32, i32
  }
  func.func @transform_5(%arg0: i32, %arg1: i32) -> (i32, i32) {
    %c0_i32 = arith.constant 0 : i32
    %c0_i32_0 = arith.constant 0 : i32
    return %arg0, %c0_i32 : i32, i32
  }
}

module attributes {stable_mosaic.version = 11 : i64} {
  func.func @base_head_kernel(%arg0: i32, %arg1: i32, %arg2: memref<8x1024xf32, #tpu.memory_space<vmem>>, %arg3: memref<1024x128xbf16, #tpu.memory_space<vmem>>, %arg4: memref<1x128xf32, #tpu.memory_space<vmem>>, %arg5: memref<128x128xbf16, #tpu.memory_space<vmem>>, %arg6: memref<1x128xf32, #tpu.memory_space<vmem>>, %arg7: memref<8x128xf32, #tpu.memory_space<vmem>>, %arg8: memref<8x128xf32, #tpu.memory_space<vmem>>) attributes {dimension_semantics = [#tpu.dimension_semantics<parallel>, #tpu.dimension_semantics<arbitrary>], iteration_bounds = array<i64: 1, 1>, scalar_prefetch = 0 : i64, scratch_operands = 1 : i64, tpu.core_type = #tpu.core_type<tc>, window_params = [{transform_indices = @transform_0, window_bounds = array<i64: 8, 1024>}, {transform_indices = @transform_1, window_bounds = array<i64: 1024, 128>}, {pipeline_mode = #tpu.pipeline_mode<synchronous>, transform_indices = @transform_2, window_bounds = array<i64: 1, 128>}, {pipeline_mode = #tpu.pipeline_mode<synchronous>, transform_indices = @transform_3, window_bounds = array<i64: 128, 128>}, {pipeline_mode = #tpu.pipeline_mode<synchronous>, transform_indices = @transform_4, window_bounds = array<i64: 1, 128>}, {transform_indices = @transform_5, window_bounds = array<i64: 8, 128>}]} {
    %c0_i32 = arith.constant 0 : i32
    %0 = arith.cmpi eq, %arg1, %c0_i32 : i32
    %1 = arith.extui %0 : i1 to i32
    %c0_i32_0 = arith.constant 0 : i32
    %2 = arith.cmpi ne, %1, %c0_i32_0 : i32
    scf.if %2 {
      %cst_10 = arith.constant 0.000000e+00 : f32
      %13 = vector.broadcast %cst_10 : f32 to vector<8x128xf32>
      %c0_11 = arith.constant 0 : index
      %c0_12 = arith.constant 0 : index
      %14 = vector.load %arg8[%c0_11, %c0_12] : memref<8x128xf32, #tpu.memory_space<vmem>>, vector<8x128xf32>
      tpu.vector_store %arg8[%c0_11, %c0_12], %13 {strides = array<i32>} : memref<8x128xf32, #tpu.memory_space<vmem>>, vector<8x128xf32>,
    } else {
    }
    %c0 = arith.constant 0 : index
    %c0_1 = arith.constant 0 : index
    %3 = vector.load %arg8[%c0, %c0_1] : memref<8x128xf32, #tpu.memory_space<vmem>>, vector<8x128xf32>
    %c0_2 = arith.constant 0 : index
    %c0_3 = arith.constant 0 : index
    %4 = vector.load %arg2[%c0_2, %c0_3] : memref<8x1024xf32, #tpu.memory_space<vmem>>, vector<8x1024xf32>
    %5 = arith.truncf %4 : vector<8x1024xf32> to vector<8x1024xbf16>
    %c0_4 = arith.constant 0 : index
    %c0_5 = arith.constant 0 : index
    %6 = vector.load %arg3[%c0_4, %c0_5] : memref<1024x128xbf16, #tpu.memory_space<vmem>>, vector<1024x128xbf16>
    %cst = arith.constant dense<0.000000e+00> : vector<8x128xf32>
    %7 = tpu.matmul %5, %6, %cst {dimension_numbers = #tpu.dot_dimension_numbers<[1], [0], [0], [1], [0, 0, 1, 1], [], []>} : vector<8x1024xbf16>, vector<1024x128xbf16>, vector<8x128xf32> -> vector<8x128xf32>
    %8 = arith.addf %3, %7 : vector<8x128xf32>
    %c0_6 = arith.constant 0 : index
    %c0_7 = arith.constant 0 : index
    %9 = vector.load %arg8[%c0_6, %c0_7] : memref<8x128xf32, #tpu.memory_space<vmem>>, vector<8x128xf32>
    tpu.vector_store %arg8[%c0_6, %c0_7], %8 {strides = array<i32>} : memref<8x128xf32, #tpu.memory_space<vmem>>, vector<8x128xf32>,
    %c0_i32_8 = arith.constant 0 : i32
    %10 = arith.cmpi eq, %arg1, %c0_i32_8 : i32
    %11 = arith.extui %10 : i1 to i32
    %c0_i32_9 = arith.constant 0 : i32
    %12 = arith.cmpi ne, %11, %c0_i32_9 : i32
    scf.if %12 {
      %c0_10 = arith.constant 0 : index
      %c0_11 = arith.constant 0 : index
      %13 = vector.load %arg8[%c0_10, %c0_11] : memref<8x128xf32, #tpu.memory_space<vmem>>, vector<8x128xf32>
      %c0_12 = arith.constant 0 : index
      %c0_13 = arith.constant 0 : index
      %14 = vector.load %arg4[%c0_12, %c0_13] : memref<1x128xf32, #tpu.memory_space<vmem>>, vector<1x128xf32>
      %15 = vector.broadcast %14 : vector<1x128xf32> to vector<8x128xf32>
      %16 = arith.addf %13, %15 : vector<8x128xf32>
      %cst_14 = arith.constant 0.000000e+00 : f32
      %17 = vector.broadcast %cst_14 : f32 to vector<8x128xf32>
      %18 = arith.maximumf %16, %17 : vector<8x128xf32>
      %19 = arith.truncf %18 : vector<8x128xf32> to vector<8x128xbf16>
      %c0_15 = arith.constant 0 : index
      %c0_16 = arith.constant 0 : index
      %20 = vector.load %arg5[%c0_15, %c0_16] : memref<128x128xbf16, #tpu.memory_space<vmem>>, vector<128x128xbf16>
      %cst_17 = arith.constant dense<0.000000e+00> : vector<8x128xf32>
      %21 = tpu.matmul %19, %20, %cst_17 {dimension_numbers = #tpu.dot_dimension_numbers<[1], [0], [0], [1], [0, 0, 1, 1], [], []>} : vector<8x128xbf16>, vector<128x128xbf16>, vector<8x128xf32> -> vector<8x128xf32>
      %c0_18 = arith.constant 0 : index
      %c0_19 = arith.constant 0 : index
      %22 = vector.load %arg6[%c0_18, %c0_19] : memref<1x128xf32, #tpu.memory_space<vmem>>, vector<1x128xf32>
      %23 = vector.broadcast %22 : vector<1x128xf32> to vector<8x128xf32>
      %24 = arith.addf %21, %23 : vector<8x128xf32>
      %c0_20 = arith.constant 0 : index
      %c0_21 = arith.constant 0 : index
      %25 = vector.load %arg7[%c0_20, %c0_21] : memref<8x128xf32, #tpu.memory_space<vmem>>, vector<8x128xf32>
      tpu.vector_store %arg7[%c0_20, %c0_21], %24 {strides = array<i32>} : memref<8x128xf32, #tpu.memory_space<vmem>>, vector<8x128xf32>,
    } else {
    }
    return
  }
  func.func @transform_0(%arg0: i32, %arg1: i32) -> (i32, i32) {
    %c0_i32 = arith.constant 0 : i32
    return %arg0, %arg1 : i32, i32
  }
  func.func @transform_1(%arg0: i32, %arg1: i32) -> (i32, i32) {
    %c0_i32 = arith.constant 0 : i32
    %c0_i32_0 = arith.constant 0 : i32
    return %arg1, %c0_i32 : i32, i32
  }
  func.func @transform_2(%arg0: i32, %arg1: i32) -> (i32, i32) {
    %c0_i32 = arith.constant 0 : i32
    %c0_i32_0 = arith.constant 0 : i32
    %c0_i32_1 = arith.constant 0 : i32
    return %c0_i32, %c0_i32_0 : i32, i32
  }
  func.func @transform_3(%arg0: i32, %arg1: i32) -> (i32, i32) {
    %c0_i32 = arith.constant 0 : i32
    %c0_i32_0 = arith.constant 0 : i32
    %c0_i32_1 = arith.constant 0 : i32
    return %c0_i32, %c0_i32_0 : i32, i32
  }
  func.func @transform_4(%arg0: i32, %arg1: i32) -> (i32, i32) {
    %c0_i32 = arith.constant 0 : i32
    %c0_i32_0 = arith.constant 0 : i32
    %c0_i32_1 = arith.constant 0 : i32
    return %c0_i32, %c0_i32_0 : i32, i32
  }
  func.func @transform_5(%arg0: i32, %arg1: i32) -> (i32, i32) {
    %c0_i32 = arith.constant 0 : i32
    %c0_i32_0 = arith.constant 0 : i32
    return %arg0, %c0_i32 : i32, i32
  }
}

</mosaic_0001>

<llo_original>
// kernel: tpu_custom_call.1
$region0: #{tpu_custom_call.1}
  #allocation0 [shape = 'u32[]', space=smem, size = 0x4, offset = 0x4, fixed_abs, tag = 'smem constant byte address 0x4 - core index']
  #allocation1 [shape = 'u32[144,128]{1,0:T(1,128)}', space=vmem, size = 0x12000, scoped, tag = 'internal scratch']
  #allocation2 [shape = 'f32[8,128]{1,0:T(8,128)}', space=vmem, size = 0x1000, scoped, tag = 'scratch operand']
  %s0 = inlined_call_operand.hbm [shape: f32[8,1024], index: 0, kind: input, shape index: {}]
  %s1 = inlined_call_operand.hbm [shape: bf16[1024,128], index: 1, kind: input, shape index: {}]
  %s2 = inlined_call_operand.vmem [shape: f32[1,128], index: 2, kind: input, shape index: {}]
  %s3 = inlined_call_operand.hbm [shape: bf16[128,128], index: 3, kind: input, shape index: {}]
  %s4 = inlined_call_operand.vmem [shape: f32[1,128], index: 4, kind: input, shape index: {}]
  %s5 = inlined_call_operand.hbm [shape: f32[8,128], index: 5, kind: output, shape index: {}]
  %s6 = sld [smem:[#allocation0]]
  $region50: #{tpu_custom_call.1} parent=0
    _
  %s8 = ssub.s32 1, %s6
  %s9 = scalar_select 0, %s8, %s6
  $region1: #{tpu_custom_call.1} parent=0
    #allocation3 [shape = 'u8[32768]{0}', space=vmem, size = 0x8000, scoped, tag = 'input window, operand 0, single buffered']
    #allocation4 [shape = 's32[1]{0}', space=sflag, size = 0x4, scoped, tag = 'scoped memory for tpu_custom_call.1']
    #allocation5 [shape = 's32[1]{0}', space=sflag, size = 0x4, scoped, tag = 'scoped memory for tpu_custom_call.1']
    #allocation6 [shape = 'u8[262144]{0}', space=vmem, size = 0x40000, scoped, tag = 'input window, operand 1, single buffered']
    #allocation7 [shape = 's32[1]{0}', space=sflag, size = 0x4, scoped, tag = 'scoped memory for tpu_custom_call.1']
    #allocation8 [shape = 'u8[32768]{0}', space=vmem, size = 0x8000, scoped, tag = 'input window, operand 3, single buffered']
    #allocation9 [shape = 'u8[4096]{0}', space=vmem, size = 0x1000, scoped, tag = 'output window, operand 0, single buffered']
    %10 = vsyncpa [#allocation4], 0
    %11 = vsyncpa [#allocation7], 0
    %12 = vsyncpa [#allocation5], 0
    // Predicated region
    $region2: #{tpu_custom_call.1} parent=1 // pred_check
      _
    $region3: #{tpu_custom_call.1} parent=1 // pred_check_branch
      %14 = sbr.rel (0) target = $region5
    $region4: #{tpu_custom_call.1} parent=1 // pred_region
      %s16 = ssub.s32 1024, 1024
      %17 = vsyncadd [#allocation4], %s16
      %s19 = sshll.u32 [#allocation3], 4
      %s20 = int_to_ptr.vmem [resolvable:$true] %s19
      %22 = dma.hbm_to_vmem [thread:$0]  %s0, 1024, %s20, [#allocation4]
    $region5: #{tpu_custom_call.1} parent=1 // pred_fallthru
      _
    // Predicated region
    $region6: #{tpu_custom_call.1} parent=1 // pred_check
      _
    $region7: #{tpu_custom_call.1} parent=1 // pred_check_branch
      %24 = sbr.rel (0) target = $region9
    $region8: #{tpu_custom_call.1} parent=1 // pred_region
      %s26 = ssub.s32 8192, 8192
      %27 = vsyncadd [#allocation7], %s26
      %s28 = sshll.u32 [#allocation6], 4
      %s29 = int_to_ptr.vmem [resolvable:$true] %s28
      %34 = dma.hbm_to_vmem [thread:$0]  %s1, 8192, %s29, [#allocation7], 64, 64, 4
    $region9: #{tpu_custom_call.1} parent=1 // pred_fallthru
      _
    // Predicated region
    $region10: #{tpu_custom_call.1} parent=1 // pred_check
      _
    $region11: #{tpu_custom_call.1} parent=1 // pred_check_branch
      %36 = sbr.rel (0) target = $region13
    $region12: #{tpu_custom_call.1} parent=1 // pred_region
      _
    $region13: #{tpu_custom_call.1} parent=1 // pred_fallthru
      _
    // Predicated region
    $region14: #{tpu_custom_call.1} parent=1 // pred_check
      _
    $region15: #{tpu_custom_call.1} parent=1 // pred_check_branch
      %38 = sbr.rel (0) target = $region17
    $region16: #{tpu_custom_call.1} parent=1 // pred_region
      %s40 = ssub.s32 1024, 1024
      %41 = vsyncadd [#allocation7], %s40
      %s42 = sshll.u32 [#allocation8], 4
      %s43 = int_to_ptr.vmem [resolvable:$true] %s42
      %48 = dma.hbm_to_vmem [thread:$0]  %s3, 1024, %s43, [#allocation7], 64, 64, 4
    $region17: #{tpu_custom_call.1} parent=1 // pred_fallthru
      _
    // Predicated region
    $region18: #{tpu_custom_call.1} parent=1 // pred_check
      _
    $region19: #{tpu_custom_call.1} parent=1 // pred_check_branch
      %50 = sbr.rel (0) target = $region21
    $region20: #{tpu_custom_call.1} parent=1 // pred_region
      _
    $region21: #{tpu_custom_call.1} parent=1 // pred_fallthru
      _
    // Predicated region
    $region22: #{tpu_custom_call.1} parent=1 // pred_check
      _
    $region23: #{tpu_custom_call.1} parent=1 // pred_check_branch
      %52 = sbr.rel (0) target = $region25
    $region24: #{tpu_custom_call.1} parent=1 // pred_region
      %53 = dma.done [#allocation4], 1024
    $region25: #{tpu_custom_call.1} parent=1 // pred_fallthru
      _
    // Predicated region
    $region26: #{tpu_custom_call.1} parent=1 // pred_check
      _
    $region27: #{tpu_custom_call.1} parent=1 // pred_check_branch
      %55 = sbr.rel (0) target = $region29
    $region28: #{tpu_custom_call.1} parent=1 // pred_region
      %56 = dma.done [#allocation7], 8192
    $region29: #{tpu_custom_call.1} parent=1 // pred_fallthru
      _
    // Predicated region
    $region30: #{tpu_custom_call.1} parent=1 // pred_check
      _
    $region31: #{tpu_custom_call.1} parent=1 // pred_check_branch
      %58 = sbr.rel (0) target = $region33
    $region32: #{tpu_custom_call.1} parent=1 // pred_region
      %59 = dma.done [#allocation7], 1024
    $region33: #{tpu_custom_call.1} parent=1 // pred_fallthru
      _
    %p61 = scmp.eq.s32.totalorder 0, 0
    // Predicated region
    $region34: #{tpu_custom_call.1} parent=1 // pred_check
      %p62 = pneg %p61
    $region35: #{tpu_custom_call.1} parent=1 // pred_check_branch
      %64 = sbr.rel (%p62) target = $region37
    $region36: #{tpu_custom_call.1} parent=1 // pred_region
      %65 = vst [vmem:[#allocation2] sm:$0xff] 0.0
    $region37: #{tpu_custom_call.1} parent=1 // pred_fallthru
      _
    %v66 = vld [vmem:[#allocation2] sm:$0xff]
    %v67 = vld [vmem:[#allocation3] sm:$0xff]
    %v68 = vld [vmem:[#allocation3 + $0x8] sm:$0xff]
    %v69 = vld [vmem:[#allocation3 + $0x10] sm:$0xff]
    %v70 = vld [vmem:[#allocation3 + $0x18] sm:$0xff]
    %v71 = vld [vmem:[#allocation3 + $0x20] sm:$0xff]
    %v72 = vld [vmem:[#allocation3 + $0x28] sm:$0xff]
    %v73 = vld [vmem:[#allocation3 + $0x30] sm:$0xff]
    %v74 = vld [vmem:[#allocation3 + $0x38] sm:$0xff]
    %v75 = vpack.c.bf16 %v67, %v67
    %v76 = vpack.c.bf16 %v68, %v68
    %v77 = vpack.c.bf16 %v69, %v69
    %v78 = vpack.c.bf16 %v70, %v70
    %v79 = vpack.c.bf16 %v71, %v71
    %v80 = vpack.c.bf16 %v72, %v72
    %v81 = vpack.c.bf16 %v73, %v73
    %v82 = vpack.c.bf16 %v74, %v74
    %v83 = vld [vmem:[#allocation6] sm:$0xf]
    %v84 = vld [vmem:[#allocation6 + $0x4] sm:$0xf]
    %v85 = vld [vmem:[#allocation6 + $0x8] sm:$0xf]
    %v86 = vld [vmem:[#allocation6 + $0xc] sm:$0xf]
    %v87 = vld [vmem:[#allocation6 + $0x10] sm:$0xf]
    %v88 = vld [vmem:[#allocation6 + $0x14] sm:$0xf]
    %v89 = vld [vmem:[#allocation6 + $0x18] sm:$0xf]
    %v90 = vld [vmem:[#allocation6 + $0x1c] sm:$0xf]
    %v91 = vld [vmem:[#allocation6 + $0x20] sm:$0xf]
    %v92 = vld [vmem:[#allocation6 + $0x24] sm:$0xf]
    %v93 = vld [vmem:[#allocation6 + $0x28] sm:$0xf]
    %v94 = vld [vmem:[#allocation6 + $0x2c] sm:$0xf]
    %v95 = vld [vmem:[#allocation6 + $0x30] sm:$0xf]
    %v96 = vld [vmem:[#allocation6 + $0x34] sm:$0xf]
    %v97 = vld [vmem:[#allocation6 + $0x38] sm:$0xf]
    %v98 = vld [vmem:[#allocation6 + $0x3c] sm:$0xf]
    %v99 = vld [vmem:[#allocation6 + $0x40] sm:$0xf]
    %v100 = vld [vmem:[#allocation6 + $0x44] sm:$0xf]
    %v101 = vld [vmem:[#allocation6 + $0x48] sm:$0xf]
    %v102 = vld [vmem:[#allocation6 + $0x4c] sm:$0xf]
    %v103 = vld [vmem:[#allocation6 + $0x50] sm:$0xf]
    %v104 = vld [vmem:[#allocation6 + $0x54] sm:$0xf]
    %v105 = vld [vmem:[#allocation6 + $0x58] sm:$0xf]
    %v106 = vld [vmem:[#allocation6 + $0x5c] sm:$0xf]
    %v107 = vld [vmem:[#allocation6 + $0x60] sm:$0xf]
    %v108 = vld [vmem:[#allocation6 + $0x64] sm:$0xf]
    %v109 = vld [vmem:[#allocation6 + $0x68] sm:$0xf]
    %v110 = vld [vmem:[#allocation6 + $0x6c] sm:$0xf]
    %v111 = vld [vmem:[#allocation6 + $0x70] sm:$0xf]
    %v112 = vld [vmem:[#allocation6 + $0x74] sm:$0xf]
    %v113 = vld [vmem:[#allocation6 + $0x78] sm:$0xf]
    %v114 = vld [vmem:[#allocation6 + $0x7c] sm:$0xf]
    %v115 = vld [vmem:[#allocation6 + $0x80] sm:$0xf]
    %v116 = vld [vmem:[#allocation6 + $0x84] sm:$0xf]
    %v117 = vld [vmem:[#allocation6 + $0x88] sm:$0xf]
    %v118 = vld [vmem:[#allocation6 + $0x8c] sm:$0xf]
    %v119 = vld [vmem:[#allocation6 + $0x90] sm:$0xf]
    %v120 = vld [vmem:[#allocation6 + $0x94] sm:$0xf]
    %v121 = vld [vmem:[#allocation6 + $0x98] sm:$0xf]
    %v122 = vld [vmem:[#allocation6 + $0x9c] sm:$0xf]
    %v123 = vld [vmem:[#allocation6 + $0xa0] sm:$0xf]
    %v124 = vld [vmem:[#allocation6 + $0xa4] sm:$0xf]
    %v125 = vld [vmem:[#allocation6 + $0xa8] sm:$0xf]
    %v126 = vld [vmem:[#allocation6 + $0xac] sm:$0xf]
    %v127 = vld [vmem:[#allocation6 + $0xb0] sm:$0xf]
    %v128 = vld [vmem:[#allocation6 + $0xb4] sm:$0xf]
    %v129 = vld [vmem:[#allocation6 + $0xb8] sm:$0xf]
    %v130 = vld [vmem:[#allocation6 + $0xbc] sm:$0xf]
    %v131 = vld [vmem:[#allocation6 + $0xc0] sm:$0xf]
    %v132 = vld [vmem:[#allocation6 + $0xc4] sm:$0xf]
    %v133 = vld [vmem:[#allocation6 + $0xc8] sm:$0xf]
    %v134 = vld [vmem:[#allocation6 + $0xcc] sm:$0xf]
    %v135 = vld [vmem:[#allocation6 + $0xd0] sm:$0xf]
    %v136 = vld [vmem:[#allocation6 + $0xd4] sm:$0xf]
    %v137 = vld [vmem:[#allocation6 + $0xd8] sm:$0xf]
    %v138 = vld [vmem:[#allocation6 + $0xdc] sm:$0xf]
    %v139 = vld [vmem:[#allocation6 + $0xe0] sm:$0xf]
    %v140 = vld [vmem:[#allocation6 + $0xe4] sm:$0xf]
    %v141 = vld [vmem:[#allocation6 + $0xe8] sm:$0xf]
    %v142 = vld [vmem:[#allocation6 + $0xec] sm:$0xf]
    %v143 = vld [vmem:[#allocation6 + $0xf0] sm:$0xf]
    %v144 = vld [vmem:[#allocation6 + $0xf4] sm:$0xf]
    %v145 = vld [vmem:[#allocation6 + $0xf8] sm:$0xf]
    %v146 = vld [vmem:[#allocation6 + $0xfc] sm:$0xf]
    %v147 = vld [vmem:[#allocation6 + $0x100] sm:$0xf]
    %v148 = vld [vmem:[#allocation6 + $0x104] sm:$0xf]
    %v149 = vld [vmem:[#allocation6 + $0x108] sm:$0xf]
    %v150 = vld [vmem:[#allocation6 + $0x10c] sm:$0xf]
    %v151 = vld [vmem:[#allocation6 + $0x110] sm:$0xf]
    %v152 = vld [vmem:[#allocation6 + $0x114] sm:$0xf]
    %v153 = vld [vmem:[#allocation6 + $0x118] sm:$0xf]
    %v154 = vld [vmem:[#allocation6 + $0x11c] sm:$0xf]
    %v155 = vld [vmem:[#allocation6 + $0x120] sm:$0xf]
    %v156 = vld [vmem:[#allocation6 + $0x124] sm:$0xf]
    %v157 = vld [vmem:[#allocation6 + $0x128] sm:$0xf]
    %v158 = vld [vmem:[#allocation6 + $0x12c] sm:$0xf]
    %v159 = vld [vmem:[#allocation6 + $0x130] sm:$0xf]
    %v160 = vld [vmem:[#allocation6 + $0x134] sm:$0xf]
    %v161 = vld [vmem:[#allocation6 + $0x138] sm:$0xf]
    %v162 = vld [vmem:[#allocation6 + $0x13c] sm:$0xf]
    %v163 = vld [vmem:[#allocation6 + $0x140] sm:$0xf]
    %v164 = vld [vmem:[#allocation6 + $0x144] sm:$0xf]
    %v165 = vld [vmem:[#allocation6 + $0x148] sm:$0xf]
    %v166 = vld [vmem:[#allocation6 + $0x14c] sm:$0xf]
    %v167 = vld [vmem:[#allocation6 + $0x150] sm:$0xf]
    %v168 = vld [vmem:[#allocation6 + $0x154] sm:$0xf]
    %v169 = vld [vmem:[#allocation6 + $0x158] sm:$0xf]
    %v170 = vld [vmem:[#allocation6 + $0x15c] sm:$0xf]
    %v171 = vld [vmem:[#allocation6 + $0x160] sm:$0xf]
    %v172 = vld [vmem:[#allocation6 + $0x164] sm:$0xf]
    %v173 = vld [vmem:[#allocation6 + $0x168] sm:$0xf]
    %v174 = vld [vmem:[#allocation6 + $0x16c] sm:$0xf]
    %v175 = vld [vmem:[#allocation6 + $0x170] sm:$0xf]
    %v176 = vld [vmem:[#allocation6 + $0x174] sm:$0xf]
    %v177 = vld [vmem:[#allocation6 + $0x178] sm:$0xf]
    %v178 = vld [vmem:[#allocation6 + $0x17c] sm:$0xf]
    %v179 = vld [vmem:[#allocation6 + $0x180] sm:$0xf]
    %v180 = vld [vmem:[#allocation6 + $0x184] sm:$0xf]
    %v181 = vld [vmem:[#allocation6 + $0x188] sm:$0xf]
    %v182 = vld [vmem:[#allocation6 + $0x18c] sm:$0xf]
    %v183 = vld [vmem:[#allocation6 + $0x190] sm:$0xf]
    %v184 = vld [vmem:[#allocation6 + $0x194] sm:$0xf]
    %v185 = vld [vmem:[#allocation6 + $0x198] sm:$0xf]
    %v186 = vld [vmem:[#allocation6 + $0x19c] sm:$0xf]
    %v187 = vld [vmem:[#allocation6 + $0x1a0] sm:$0xf]
    %v188 = vld [vmem:[#allocation6 + $0x1a4] sm:$0xf]
    %v189 = vld [vmem:[#allocation6 + $0x1a8] sm:$0xf]
    %v190 = vld [vmem:[#allocation6 + $0x1ac] sm:$0xf]
    %v191 = vld [vmem:[#allocation6 + $0x1b0] sm:$0xf]
    %v192 = vld [vmem:[#allocation6 + $0x1b4] sm:$0xf]
    %v193 = vld [vmem:[#allocation6 + $0x1b8] sm:$0xf]
    %v194 = vld [vmem:[#allocation6 + $0x1bc] sm:$0xf]
    %v195 = vld [vmem:[#allocation6 + $0x1c0] sm:$0xf]
    %v196 = vld [vmem:[#allocation6 + $0x1c4] sm:$0xf]
    %v197 = vld [vmem:[#allocation6 + $0x1c8] sm:$0xf]
    %v198 = vld [vmem:[#allocation6 + $0x1cc] sm:$0xf]
    %v199 = vld [vmem:[#allocation6 + $0x1d0] sm:$0xf]
    %v200 = vld [vmem:[#allocation6 + $0x1d4] sm:$0xf]
    %v201 = vld [vmem:[#allocation6 + $0x1d8] sm:$0xf]
    %v202 = vld [vmem:[#allocation6 + $0x1dc] sm:$0xf]
    %v203 = vld [vmem:[#allocation6 + $0x1e0] sm:$0xf]
    %v204 = vld [vmem:[#allocation6 + $0x1e4] sm:$0xf]
    %v205 = vld [vmem:[#allocation6 + $0x1e8] sm:$0xf]
    %v206 = vld [vmem:[#allocation6 + $0x1ec] sm:$0xf]
    %v207 = vld [vmem:[#allocation6 + $0x1f0] sm:$0xf]
    %v208 = vld [vmem:[#allocation6 + $0x1f4] sm:$0xf]
    %v209 = vld [vmem:[#allocation6 + $0x1f8] sm:$0xf]
    %v210 = vld [vmem:[#allocation6 + $0x1fc] sm:$0xf]
    %v339 = vunpack.c.l.b16 %v83
    %v340 = vunpack.c.l.b16 %v84
    %v341 = vunpack.c.l.b16 %v85
    %v342 = vunpack.c.l.b16 %v86
    %v343 = vunpack.c.l.b16 %v87
    %v344 = vunpack.c.l.b16 %v88
    %v345 = vunpack.c.l.b16 %v89
    %v346 = vunpack.c.l.b16 %v90
    %v347 = vunpack.c.l.b16 %v91
    %v348 = vunpack.c.l.b16 %v92
    %v349 = vunpack.c.l.b16 %v93
    %v350 = vunpack.c.l.b16 %v94
    %v351 = vunpack.c.l.b16 %v95
    %v352 = vunpack.c.l.b16 %v96
    %v353 = vunpack.c.l.b16 %v97
    %v354 = vunpack.c.l.b16 %v98
    %v355 = vunpack.c.l.b16 %v99
    %v356 = vunpack.c.l.b16 %v100
    %v357 = vunpack.c.l.b16 %v101
    %v358 = vunpack.c.l.b16 %v102
    %v359 = vunpack.c.l.b16 %v103
    %v360 = vunpack.c.l.b16 %v104
    %v361 = vunpack.c.l.b16 %v105
    %v362 = vunpack.c.l.b16 %v106
    %v363 = vunpack.c.l.b16 %v107
    %v364 = vunpack.c.l.b16 %v108
    %v365 = vunpack.c.l.b16 %v109
    %v366 = vunpack.c.l.b16 %v110
    %v367 = vunpack.c.l.b16 %v111
    %v368 = vunpack.c.l.b16 %v112
    %v369 = vunpack.c.l.b16 %v113
    %v370 = vunpack.c.l.b16 %v114
    %v371 = vunpack.c.l.b16 %v115
    %v372 = vunpack.c.l.b16 %v116
    %v373 = vunpack.c.l.b16 %v117
    %v374 = vunpack.c.l.b16 %v118
    %v375 = vunpack.c.l.b16 %v119
    %v376 = vunpack.c.l.b16 %v120
    %v377 = vunpack.c.l.b16 %v121
    %v378 = vunpack.c.l.b16 %v122
    %v379 = vunpack.c.l.b16 %v123
    %v380 = vunpack.c.l.b16 %v124
    %v381 = vunpack.c.l.b16 %v125
    %v382 = vunpack.c.l.b16 %v126
    %v383 = vunpack.c.l.b16 %v127
    %v384 = vunpack.c.l.b16 %v128
    %v385 = vunpack.c.l.b16 %v129
    %v386 = vunpack.c.l.b16 %v130
    %v387 = vunpack.c.l.b16 %v131
    %v388 = vunpack.c.l.b16 %v132
    %v389 = vunpack.c.l.b16 %v133
    %v390 = vunpack.c.l.b16 %v134
    %v391 = vunpack.c.l.b16 %v135
    %v392 = vunpack.c.l.b16 %v136
    %v393 = vunpack.c.l.b16 %v137
    %v394 = vunpack.c.l.b16 %v138
    %v395 = vunpack.c.l.b16 %v139
    %v396 = vunpack.c.l.b16 %v140
    %v397 = vunpack.c.l.b16 %v141
    %v398 = vunpack.c.l.b16 %v142
    %v399 = vunpack.c.l.b16 %v143
    %v400 = vunpack.c.l.b16 %v144
    %v401 = vunpack.c.l.b16 %v145
    %v402 = vunpack.c.l.b16 %v146
    %v403 = vunpack.c.l.b16 %v147
    %v404 = vunpack.c.l.b16 %v148
    %v405 = vunpack.c.l.b16 %v149
    %v406 = vunpack.c.l.b16 %v150
    %v407 = vunpack.c.l.b16 %v151
    %v408 = vunpack.c.l.b16 %v152
    %v409 = vunpack.c.l.b16 %v153
    %v410 = vunpack.c.l.b16 %v154
    %v411 = vunpack.c.l.b16 %v155
    %v412 = vunpack.c.l.b16 %v156
    %v413 = vunpack.c.l.b16 %v157
    %v414 = vunpack.c.l.b16 %v158
    %v415 = vunpack.c.l.b16 %v159
    %v416 = vunpack.c.l.b16 %v160
    %v417 = vunpack.c.l.b16 %v161
    %v418 = vunpack.c.l.b16 %v162
    %v419 = vunpack.c.l.b16 %v163
    %v420 = vunpack.c.l.b16 %v164
    %v421 = vunpack.c.l.b16 %v165
    %v422 = vunpack.c.l.b16 %v166
    %v423 = vunpack.c.l.b16 %v167
    %v424 = vunpack.c.l.b16 %v168
    %v425 = vunpack.c.l.b16 %v169
    %v426 = vunpack.c.l.b16 %v170
    %v427 = vunpack.c.l.b16 %v171
    %v428 = vunpack.c.l.b16 %v172
    %v429 = vunpack.c.l.b16 %v173
    %v430 = vunpack.c.l.b16 %v174
    %v431 = vunpack.c.l.b16 %v175
    %v432 = vunpack.c.l.b16 %v176
    %v433 = vunpack.c.l.b16 %v177
    %v434 = vunpack.c.l.b16 %v178
    %v435 = vunpack.c.l.b16 %v179
    %v436 = vunpack.c.l.b16 %v180
    %v437 = vunpack.c.l.b16 %v181
    %v438 = vunpack.c.l.b16 %v182
    %v439 = vunpack.c.l.b16 %v183
    %v440 = vunpack.c.l.b16 %v184
    %v441 = vunpack.c.l.b16 %v185
    %v442 = vunpack.c.l.b16 %v186
    %v443 = vunpack.c.l.b16 %v187
    %v444 = vunpack.c.l.b16 %v188
    %v445 = vunpack.c.l.b16 %v189
    %v446 = vunpack.c.l.b16 %v190
    %v447 = vunpack.c.l.b16 %v191
    %v448 = vunpack.c.l.b16 %v192
    %v449 = vunpack.c.l.b16 %v193
    %v450 = vunpack.c.l.b16 %v194
    %v451 = vunpack.c.l.b16 %v195
    %v452 = vunpack.c.l.b16 %v196
    %v453 = vunpack.c.l.b16 %v197
    %v454 = vunpack.c.l.b16 %v198
    %v455 = vunpack.c.l.b16 %v199
    %v456 = vunpack.c.l.b16 %v200
    %v457 = vunpack.c.l.b16 %v201
    %v458 = vunpack.c.l.b16 %v202
    %v459 = vunpack.c.l.b16 %v203
    %v460 = vunpack.c.l.b16 %v204
    %v461 = vunpack.c.l.b16 %v205
    %v462 = vunpack.c.l.b16 %v206
    %v463 = vunpack.c.l.b16 %v207
    %v464 = vunpack.c.l.b16 %v208
    %v465 = vunpack.c.l.b16 %v209
    %v466 = vunpack.c.l.b16 %v210
    %v467 = vpack.c.b16 %v340, %v339
    %v468 = vpack.c.b16 %v342, %v341
    %v469 = vpack.c.b16 %v344, %v343
    %v470 = vpack.c.b16 %v346, %v345
    %v471 = vpack.c.b16 %v348, %v347
    %v472 = vpack.c.b16 %v350, %v349
    %v473 = vpack.c.b16 %v352, %v351
    %v474 = vpack.c.b16 %v354, %v353
    %v475 = vpack.c.b16 %v356, %v355
    %v476 = vpack.c.b16 %v358, %v357
    %v477 = vpack.c.b16 %v360, %v359
    %v478 = vpack.c.b16 %v362, %v361
    %v479 = vpack.c.b16 %v364, %v363
    %v480 = vpack.c.b16 %v366, %v365
    %v481 = vpack.c.b16 %v368, %v367
    %v482 = vpack.c.b16 %v370, %v369
    %v483 = vpack.c.b16 %v372, %v371
    %v484 = vpack.c.b16 %v374, %v373
    %v485 = vpack.c.b16 %v376, %v375
    %v486 = vpack.c.b16 %v378, %v377
    %v487 = vpack.c.b16 %v380, %v379
    %v488 = vpack.c.b16 %v382, %v381
    %v489 = vpack.c.b16 %v384, %v383
    %v490 = vpack.c.b16 %v386, %v385
    %v491 = vpack.c.b16 %v388, %v387
    %v492 = vpack.c.b16 %v390, %v389
    %v493 = vpack.c.b16 %v392, %v391
    %v494 = vpack.c.b16 %v394, %v393
    %v495 = vpack.c.b16 %v396, %v395
    %v496 = vpack.c.b16 %v398, %v397
    %v497 = vpack.c.b16 %v400, %v399
    %v498 = vpack.c.b16 %v402, %v401
    %v499 = vpack.c.b16 %v404, %v403
    %v500 = vpack.c.b16 %v406, %v405
    %v501 = vpack.c.b16 %v408, %v407
    %v502 = vpack.c.b16 %v410, %v409
    %v503 = vpack.c.b16 %v412, %v411
    %v504 = vpack.c.b16 %v414, %v413
    %v505 = vpack.c.b16 %v416, %v415
    %v506 = vpack.c.b16 %v418, %v417
    %v507 = vpack.c.b16 %v420, %v419
    %v508 = vpack.c.b16 %v422, %v421
    %v509 = vpack.c.b16 %v424, %v423
    %v510 = vpack.c.b16 %v426, %v425
    %v511 = vpack.c.b16 %v428, %v427
    %v512 = vpack.c.b16 %v430, %v429
    %v513 = vpack.c.b16 %v432, %v431
    %v514 = vpack.c.b16 %v434, %v433
    %v515 = vpack.c.b16 %v436, %v435
    %v516 = vpack.c.b16 %v438, %v437
    %v517 = vpack.c.b16 %v440, %v439
    %v518 = vpack.c.b16 %v442, %v441
    %v519 = vpack.c.b16 %v444, %v443
    %v520 = vpack.c.b16 %v446, %v445
    %v521 = vpack.c.b16 %v448, %v447
    %v522 = vpack.c.b16 %v450, %v449
    %v523 = vpack.c.b16 %v452, %v451
    %v524 = vpack.c.b16 %v454, %v453
    %v525 = vpack.c.b16 %v456, %v455
    %v526 = vpack.c.b16 %v458, %v457
    %v527 = vpack.c.b16 %v460, %v459
    %v528 = vpack.c.b16 %v462, %v461
    %v529 = vpack.c.b16 %v464, %v463
    %v530 = vpack.c.b16 %v466, %v465
    %595 = vmatprep.subr.bf16.mxu0 0
    %596 = vmatpush1.bf16.msra.mxu0 %v474
    %597 = vmatprep.subr.bf16.mxu0 0
    %598 = vmatpush1.bf16.msra.mxu0 %v473
    %599 = vmatprep.subr.bf16.mxu0 0
    %600 = vmatpush1.bf16.msra.mxu0 %v472
    %601 = vmatprep.subr.bf16.mxu0 0
    %602 = vmatpush1.bf16.msra.mxu0 %v471
    %603 = vmatprep.subr.bf16.mxu0 0
    %604 = vmatpush1.bf16.msra.mxu0 %v470
    %605 = vmatprep.subr.bf16.mxu0 0
    %606 = vmatpush1.bf16.msra.mxu0 %v469
    %607 = vmatprep.subr.bf16.mxu0 0
    %608 = vmatpush1.bf16.msra.mxu0 %v468
    %609 = vmatprep.subr.bf16.mxu0 0
    %610 = vmatpush1.bf16.msra.mxu0 %v467
    %611 = vmatprep.subr.bf16.mxu0 0
    %612 = vmatpush2.bf16.msra.mxu0 %v482
    %613 = vmatprep.subr.bf16.mxu0 0
    %614 = vmatpush2.bf16.msra.mxu0 %v481
    %615 = vmatprep.subr.bf16.mxu0 0
    %616 = vmatpush2.bf16.msra.mxu0 %v480
    %617 = vmatprep.subr.bf16.mxu0 0
    %618 = vmatpush2.bf16.msra.mxu0 %v479
    %619 = vmatprep.subr.bf16.mxu0 0
    %620 = vmatpush2.bf16.msra.mxu0 %v478
    %621 = vmatprep.subr.bf16.mxu0 0
    %622 = vmatpush2.bf16.msra.mxu0 %v477
    %623 = vmatprep.subr.bf16.mxu0 0
    %624 = vmatpush2.bf16.msra.mxu0 %v476
    %625 = vmatprep.subr.bf16.mxu0 0
    %626 = vmatpush2.bf16.msra.mxu0 %v475
    %627 = vmatprep.mubr.bf16.mxu0 %v76
    %628 = vmatmul.mubr.bf16.gmra.mxu0 %v75
    %v629 = vpop.f32.mrf.mxu0
    %v630 = vadd.f32 0.0, %v629
    %v631 = vpop.f32.mrf.mxu0
    %v632 = vpop.f32.mrf.mxu0
    %v633 = vpop.f32.mrf.mxu0
    %634 = vdwg.mxu0
    %635 = vmatprep.subr.bf16.mxu0 0
    %636 = vmatpush1.bf16.msra.mxu0 %v490
    %637 = vmatprep.subr.bf16.mxu0 0
    %638 = vmatpush1.bf16.msra.mxu0 %v489
    %639 = vmatprep.subr.bf16.mxu0 0
    %640 = vmatpush1.bf16.msra.mxu0 %v488
    %641 = vmatprep.subr.bf16.mxu0 0
    %642 = vmatpush1.bf16.msra.mxu0 %v487
    %643 = vmatprep.subr.bf16.mxu0 0
    %644 = vmatpush1.bf16.msra.mxu0 %v486
    %645 = vmatprep.subr.bf16.mxu0 0
    %646 = vmatpush1.bf16.msra.mxu0 %v485
    %647 = vmatprep.subr.bf16.mxu0 0
    %648 = vmatpush1.bf16.msra.mxu0 %v484
    %649 = vmatprep.subr.bf16.mxu0 0
    %650 = vmatpush1.bf16.msra.mxu0 %v483
    %651 = vmatprep.subr.bf16.mxu0 0
    %652 = vmatpush2.bf16.msra.mxu0 %v498
    %653 = vmatprep.subr.bf16.mxu0 0
    %654 = vmatpush2.bf16.msra.mxu0 %v497
    %655 = vmatprep.subr.bf16.mxu0 0
    %656 = vmatpush2.bf16.msra.mxu0 %v496
    %657 = vmatprep.subr.bf16.mxu0 0
    %658 = vmatpush2.bf16.msra.mxu0 %v495
    %659 = vmatprep.subr.bf16.mxu0 0
    %660 = vmatpush2.bf16.msra.mxu0 %v494
    %661 = vmatprep.subr.bf16.mxu0 0
    %662 = vmatpush2.bf16.msra.mxu0 %v493
    %663 = vmatprep.subr.bf16.mxu0 0
    %664 = vmatpush2.bf16.msra.mxu0 %v492
    %665 = vmatprep.subr.bf16.mxu0 0
    %666 = vmatpush2.bf16.msra.mxu0 %v491
    %667 = vmatprep.mubr.bf16.mxu0 %v78
    %668 = vmatmul.mubr.bf16.gmra.mxu0 %v77
    %v669 = vpop.f32.mrf.mxu0
    %v670 = vadd.f32 %v630, %v669
    %v671 = vpop.f32.mrf.mxu0
    %v672 = vpop.f32.mrf.mxu0
    %v673 = vpop.f32.mrf.mxu0
    %674 = vdwg.mxu0
    %675 = vmatprep.subr.bf16.mxu0 0
    %676 = vmatpush1.bf16.msra.mxu0 %v506
    %677 = vmatprep.subr.bf16.mxu0 0
    %678 = vmatpush1.bf16.msra.mxu0 %v505
    %679 = vmatprep.subr.bf16.mxu0 0
    %680 = vmatpush1.bf16.msra.mxu0 %v504
    %681 = vmatprep.subr.bf16.mxu0 0
    %682 = vmatpush1.bf16.msra.mxu0 %v503
    %683 = vmatprep.subr.bf16.mxu0 0
    %684 = vmatpush1.bf16.msra.mxu0 %v502
    %685 = vmatprep.subr.bf16.mxu0 0
    %686 = vmatpush1.bf16.msra.mxu0 %v501
    %687 = vmatprep.subr.bf16.mxu0 0
    %688 = vmatpush1.bf16.msra.mxu0 %v500
    %689 = vmatprep.subr.bf16.mxu0 0
    %690 = vmatpush1.bf16.msra.mxu0 %v499
    %691 = vmatprep.subr.bf16.mxu0 0
    %692 = vmatpush2.bf16.msra.mxu0 %v514
    %693 = vmatprep.subr.bf16.mxu0 0
    %694 = vmatpush2.bf16.msra.mxu0 %v513
    %695 = vmatprep.subr.bf16.mxu0 0
    %696 = vmatpush2.bf16.msra.mxu0 %v512
    %697 = vmatprep.subr.bf16.mxu0 0
    %698 = vmatpush2.bf16.msra.mxu0 %v511
    %699 = vmatprep.subr.bf16.mxu0 0
    %700 = vmatpush2.bf16.msra.mxu0 %v510
    %701 = vmatprep.subr.bf16.mxu0 0
    %702 = vmatpush2.bf16.msra.mxu0 %v509
    %703 = vmatprep.subr.bf16.mxu0 0
    %704 = vmatpush2.bf16.msra.mxu0 %v508
    %705 = vmatprep.subr.bf16.mxu0 0
    %706 = vmatpush2.bf16.msra.mxu0 %v507
    %707 = vmatprep.mubr.bf16.mxu0 %v80
    %708 = vmatmul.mubr.bf16.gmra.mxu0 %v79
    %v709 = vpop.f32.mrf.mxu0
    %v710 = vadd.f32 %v670, %v709
    %v711 = vpop.f32.mrf.mxu0
    %v712 = vpop.f32.mrf.mxu0
    %v713 = vpop.f32.mrf.mxu0
    %714 = vdwg.mxu0
    %715 = vmatprep.subr.bf16.mxu0 0
    %716 = vmatpush1.bf16.msra.mxu0 %v522
    %717 = vmatprep.subr.bf16.mxu0 0
    %718 = vmatpush1.bf16.msra.mxu0 %v521
    %719 = vmatprep.subr.bf16.mxu0 0
    %720 = vmatpush1.bf16.msra.mxu0 %v520
    %721 = vmatprep.subr.bf16.mxu0 0
    %722 = vmatpush1.bf16.msra.mxu0 %v519
    %723 = vmatprep.subr.bf16.mxu0 0
    %724 = vmatpush1.bf16.msra.mxu0 %v518
    %725 = vmatprep.subr.bf16.mxu0 0
    %726 = vmatpush1.bf16.msra.mxu0 %v517
    %727 = vmatprep.subr.bf16.mxu0 0
    %728 = vmatpush1.bf16.msra.mxu0 %v516
    %729 = vmatprep.subr.bf16.mxu0 0
    %730 = vmatpush1.bf16.msra.mxu0 %v515
    %731 = vmatprep.subr.bf16.mxu0 0
    %732 = vmatpush2.bf16.msra.mxu0 %v530
    %733 = vmatprep.subr.bf16.mxu0 0
    %734 = vmatpush2.bf16.msra.mxu0 %v529
    %735 = vmatprep.subr.bf16.mxu0 0
    %736 = vmatpush2.bf16.msra.mxu0 %v528
    %737 = vmatprep.subr.bf16.mxu0 0
    %738 = vmatpush2.bf16.msra.mxu0 %v527
    %739 = vmatprep.subr.bf16.mxu0 0
    %740 = vmatpush2.bf16.msra.mxu0 %v526
    %741 = vmatprep.subr.bf16.mxu0 0
    %742 = vmatpush2.bf16.msra.mxu0 %v525
    %743 = vmatprep.subr.bf16.mxu0 0
    %744 = vmatpush2.bf16.msra.mxu0 %v524
    %745 = vmatprep.subr.bf16.mxu0 0
    %746 = vmatpush2.bf16.msra.mxu0 %v523
    %747 = vmatprep.mubr.bf16.mxu0 %v82
    %748 = vmatmul.mubr.bf16.gmra.mxu0 %v81
    %v749 = vpop.f32.mrf.mxu0
    %v750 = vadd.f32 %v710, %v749
    %v751 = vpop.f32.mrf.mxu0
    %v752 = vpop.f32.mrf.mxu0
    %v753 = vpop.f32.mrf.mxu0
    %754 = vdwg.mxu0
    %v755 = vadd.f32 %v66, %v750
    %756 = vst [vmem:[#allocation2] sm:$0xff] %v755
    // Predicated region
    $region38: #{tpu_custom_call.1} parent=1 // pred_check
      %p757 = pneg %p61
    $region39: #{tpu_custom_call.1} parent=1 // pred_check_branch
      %759 = sbr.rel (%p757) target = $region41
    $region40: #{tpu_custom_call.1} parent=1 // pred_region
      %v760 = vld [vmem:[#allocation2] sm:$0xff]
      %v761 = vld [vmem:[%s2] sm:$0x1]
      %v763 = vlaneseq
      %v764 = vshrl.u32 %v763, 7
      %v765 = vsub.s32 0, %v764
      %v766 = vrot.slane %v761, %v765
      %v768 = vadd.f32 %v760, %v766
      %v769 = vmax.f32 %v768, 0.0
      %v770 = vpack.c.bf16 %v769, %v769
      %v771 = vld [vmem:[#allocation8] sm:$0xf]
      %v772 = vld [vmem:[#allocation8 + $0x4] sm:$0xf]
      %v773 = vld [vmem:[#allocation8 + $0x8] sm:$0xf]
      %v774 = vld [vmem:[#allocation8 + $0xc] sm:$0xf]
      %v775 = vld [vmem:[#allocation8 + $0x10] sm:$0xf]
      %v776 = vld [vmem:[#allocation8 + $0x14] sm:$0xf]
      %v777 = vld [vmem:[#allocation8 + $0x18] sm:$0xf]
      %v778 = vld [vmem:[#allocation8 + $0x1c] sm:$0xf]
      %v779 = vld [vmem:[#allocation8 + $0x20] sm:$0xf]
      %v780 = vld [vmem:[#allocation8 + $0x24] sm:$0xf]
      %v781 = vld [vmem:[#allocation8 + $0x28] sm:$0xf]
      %v782 = vld [vmem:[#allocation8 + $0x2c] sm:$0xf]
      %v783 = vld [vmem:[#allocation8 + $0x30] sm:$0xf]
      %v784 = vld [vmem:[#allocation8 + $0x34] sm:$0xf]
      %v785 = vld [vmem:[#allocation8 + $0x38] sm:$0xf]
      %v786 = vld [vmem:[#allocation8 + $0x3c] sm:$0xf]
      %v787 = vld [vmem:[%s4] sm:$0x1]
      %v789 = vlaneseq
      %v790 = vshrl.u32 %v789, 7
      %v791 = vsub.s32 0, %v790
      %v792 = vrot.slane %v787, %v791
      %v810 = vunpack.c.l.b16 %v771
      %v811 = vunpack.c.l.b16 %v772
      %v812 = vunpack.c.l.b16 %v773
      %v813 = vunpack.c.l.b16 %v774
      %v814 = vunpack.c.l.b16 %v775
      %v815 = vunpack.c.l.b16 %v776
      %v816 = vunpack.c.l.b16 %v777
      %v817 = vunpack.c.l.b16 %v778
      %v818 = vunpack.c.l.b16 %v779
      %v819 = vunpack.c.l.b16 %v780
      %v820 = vunpack.c.l.b16 %v781
      %v821 = vunpack.c.l.b16 %v782
      %v822 = vunpack.c.l.b16 %v783
      %v823 = vunpack.c.l.b16 %v784
      %v824 = vunpack.c.l.b16 %v785
      %v825 = vunpack.c.l.b16 %v786
      %v826 = vpack.c.b16 %v811, %v810
      %v827 = vpack.c.b16 %v813, %v812
      %v828 = vpack.c.b16 %v815, %v814
      %v829 = vpack.c.b16 %v817, %v816
      %v830 = vpack.c.b16 %v819, %v818
      %v831 = vpack.c.b16 %v821, %v820
      %v832 = vpack.c.b16 %v823, %v822
      %v833 = vpack.c.b16 %v825, %v824
      %842 = vmatprep.subr.bf16.mxu0 0
      %843 = vmatpush1.bf16.msra.mxu0 %v833
      %844 = vmatprep.subr.bf16.mxu0 0
      %845 = vmatpush1.bf16.msra.mxu0 %v832
      %846 = vmatprep.subr.bf16.mxu0 0
      %847 = vmatpush1.bf16.msra.mxu0 %v831
      %848 = vmatprep.subr.bf16.mxu0 0
      %849 = vmatpush1.bf16.msra.mxu0 %v830
      %850 = vmatprep.subr.bf16.mxu0 0
      %851 = vmatpush1.bf16.msra.mxu0 %v829
      %852 = vmatprep.subr.bf16.mxu0 0
      %853 = vmatpush1.bf16.msra.mxu0 %v828
      %854 = vmatprep.subr.bf16.mxu0 0
      %855 = vmatpush1.bf16.msra.mxu0 %v827
      %856 = vmatprep.subr.bf16.mxu0 0
      %857 = vmatpush1.bf16.msra.mxu0 %v826
      %858 = vmatprep.subr.bf16.mxu0 0
      %859 = vmatpush2.bf16.msra.mxu0 0
      %860 = vmatprep.subr.bf16.mxu0 0
      %861 = vmatpush2.bf16.msra.mxu0 0
      %862 = vmatprep.subr.bf16.mxu0 0
      %863 = vmatpush2.bf16.msra.mxu0 0
      %864 = vmatprep.subr.bf16.mxu0 0
      %865 = vmatpush2.bf16.msra.mxu0 0
      %866 = vmatprep.subr.bf16.mxu0 0
      %867 = vmatpush2.bf16.msra.mxu0 0
      %868 = vmatprep.subr.bf16.mxu0 0
      %869 = vmatpush2.bf16.msra.mxu0 0
      %870 = vmatprep.subr.bf16.mxu0 0
      %871 = vmatpush2.bf16.msra.mxu0 0
      %872 = vmatprep.subr.bf16.mxu0 0
      %873 = vmatpush2.bf16.msra.mxu0 0
      %874 = vmatprep.mubr.bf16.mxu0 0
      %875 = vmatmul.mubr.bf16.gmra.mxu0 %v770
      %v876 = vpop.f32.mrf.mxu0
      %v877 = vadd.f32 %v792, %v876
      %v878 = vpop.f32.mrf.mxu0
      %v879 = vpop.f32.mrf.mxu0
      %v880 = vpop.f32.mrf.mxu0
      %881 = vdwg.mxu0
      %882 = vst [vmem:[#allocation9] sm:$0xff] %v877
    $region41: #{tpu_custom_call.1} parent=1 // pred_fallthru
      _
    // Predicated region
    $region42: #{tpu_custom_call.1} parent=1 // pred_check
      _
    $region43: #{tpu_custom_call.1} parent=1 // pred_check_branch
      %884 = sbr.rel (0) target = $region45
    $region44: #{tpu_custom_call.1} parent=1 // pred_region
      %s886 = ssub.s32 128, 128
      %887 = vsyncadd [#allocation5], %s886
      %s889 = sshll.u32 [#allocation9], 4
      %s890 = int_to_ptr.vmem [resolvable:$true] %s889
      %892 = dma.vmem_to_hbm [thread:$0]  %s890, 128, %s5, [#allocation5]
    $region45: #{tpu_custom_call.1} parent=1 // pred_fallthru
      _
    // Predicated region
    $region46: #{tpu_custom_call.1} parent=1 // pred_check
      _
    $region47: #{tpu_custom_call.1} parent=1 // pred_check_branch
      %894 = sbr.rel (0) target = $region49
    $region48: #{tpu_custom_call.1} parent=1 // pred_region
      %895 = dma.done [#allocation5], 128
    $region49: #{tpu_custom_call.1} parent=1 // pred_fallthru
      _
    %896 = vsyncpa [#allocation4], 1
    %897 = vsyncpa [#allocation7], 1
    %898 = vsyncpa [#allocation5], 1

// kernel: tpu_custom_call.1
$region0: #{tpu_custom_call.1}
  #allocation0 [shape = 'u32[]', space=smem, size = 0x4, offset = 0x4, fixed_abs, tag = 'smem constant byte address 0x4 - core index']
  #allocation1 [shape = 'u32[144,128]{1,0:T(1,128)}', space=vmem, size = 0x12000, scoped, tag = 'internal scratch']
  #allocation2 [shape = 'f32[8,128]{1,0:T(8,128)}', space=vmem, size = 0x1000, scoped, tag = 'scratch operand']
  %s0 = inlined_call_operand.hbm [shape: f32[8,1024], index: 0, kind: input, shape index: {}]
  %s1 = inlined_call_operand.hbm [shape: bf16[1024,128], index: 1, kind: input, shape index: {}]
  %s2 = inlined_call_operand.vmem [shape: f32[1,128], index: 2, kind: input, shape index: {}]
  %s3 = inlined_call_operand.hbm [shape: bf16[128,128], index: 3, kind: input, shape index: {}]
  %s4 = inlined_call_operand.vmem [shape: f32[1,128], index: 4, kind: input, shape index: {}]
  %s5 = inlined_call_operand.hbm [shape: f32[8,128], index: 5, kind: output, shape index: {}]
  %s6 = sld [smem:[#allocation0]]
  $region50: #{tpu_custom_call.1} parent=0
    _
  %s8 = ssub.s32 1, %s6
  %s9 = scalar_select 0, %s8, %s6
  $region1: #{tpu_custom_call.1} parent=0
    #allocation3 [shape = 'u8[32768]{0}', space=vmem, size = 0x8000, scoped, tag = 'input window, operand 0, single buffered']
    #allocation4 [shape = 's32[1]{0}', space=sflag, size = 0x4, scoped, tag = 'scoped memory for tpu_custom_call.1']
    #allocation5 [shape = 's32[1]{0}', space=sflag, size = 0x4, scoped, tag = 'scoped memory for tpu_custom_call.1']
    #allocation6 [shape = 'u8[262144]{0}', space=vmem, size = 0x40000, scoped, tag = 'input window, operand 1, single buffered']
    #allocation7 [shape = 's32[1]{0}', space=sflag, size = 0x4, scoped, tag = 'scoped memory for tpu_custom_call.1']
    #allocation8 [shape = 'u8[32768]{0}', space=vmem, size = 0x8000, scoped, tag = 'input window, operand 3, single buffered']
    #allocation9 [shape = 'u8[4096]{0}', space=vmem, size = 0x1000, scoped, tag = 'output window, operand 0, single buffered']
    %10 = vsyncpa [#allocation4], 0
    %11 = vsyncpa [#allocation7], 0
    %12 = vsyncpa [#allocation5], 0
    // Predicated region
    $region2: #{tpu_custom_call.1} parent=1 // pred_check
      _
    $region3: #{tpu_custom_call.1} parent=1 // pred_check_branch
      %14 = sbr.rel (0) target = $region5
    $region4: #{tpu_custom_call.1} parent=1 // pred_region
      %s16 = ssub.s32 1024, 1024
      %17 = vsyncadd [#allocation4], %s16
      %s19 = sshll.u32 [#allocation3], 4
      %s20 = int_to_ptr.vmem [resolvable:$true] %s19
      %22 = dma.hbm_to_vmem [thread:$0]  %s0, 1024, %s20, [#allocation4]
    $region5: #{tpu_custom_call.1} parent=1 // pred_fallthru
      _
    // Predicated region
    $region6: #{tpu_custom_call.1} parent=1 // pred_check
      _
    $region7: #{tpu_custom_call.1} parent=1 // pred_check_branch
      %24 = sbr.rel (0) target = $region9
    $region8: #{tpu_custom_call.1} parent=1 // pred_region
      %s26 = ssub.s32 8192, 8192
      %27 = vsyncadd [#allocation7], %s26
      %s28 = sshll.u32 [#allocation6], 4
      %s29 = int_to_ptr.vmem [resolvable:$true] %s28
      %34 = dma.hbm_to_vmem [thread:$0]  %s1, 8192, %s29, [#allocation7], 64, 64, 4
    $region9: #{tpu_custom_call.1} parent=1 // pred_fallthru
      _
    // Predicated region
    $region10: #{tpu_custom_call.1} parent=1 // pred_check
      _
    $region11: #{tpu_custom_call.1} parent=1 // pred_check_branch
      %36 = sbr.rel (0) target = $region13
    $region12: #{tpu_custom_call.1} parent=1 // pred_region
      _
    $region13: #{tpu_custom_call.1} parent=1 // pred_fallthru
      _
    // Predicated region
    $region14: #{tpu_custom_call.1} parent=1 // pred_check
      _
    $region15: #{tpu_custom_call.1} parent=1 // pred_check_branch
      %38 = sbr.rel (0) target = $region17
    $region16: #{tpu_custom_call.1} parent=1 // pred_region
      %s40 = ssub.s32 1024, 1024
      %41 = vsyncadd [#allocation7], %s40
      %s42 = sshll.u32 [#allocation8], 4
      %s43 = int_to_ptr.vmem [resolvable:$true] %s42
      %48 = dma.hbm_to_vmem [thread:$0]  %s3, 1024, %s43, [#allocation7], 64, 64, 4
    $region17: #{tpu_custom_call.1} parent=1 // pred_fallthru
      _
    // Predicated region
    $region18: #{tpu_custom_call.1} parent=1 // pred_check
      _
    $region19: #{tpu_custom_call.1} parent=1 // pred_check_branch
      %50 = sbr.rel (0) target = $region21
    $region20: #{tpu_custom_call.1} parent=1 // pred_region
      _
    $region21: #{tpu_custom_call.1} parent=1 // pred_fallthru
      _
    // Predicated region
    $region22: #{tpu_custom_call.1} parent=1 // pred_check
      _
    $region23: #{tpu_custom_call.1} parent=1 // pred_check_branch
      %52 = sbr.rel (0) target = $region25
    $region24: #{tpu_custom_call.1} parent=1 // pred_region
      %53 = dma.done [#allocation4], 1024
    $region25: #{tpu_custom_call.1} parent=1 // pred_fallthru
      _
    // Predicated region
    $region26: #{tpu_custom_call.1} parent=1 // pred_check
      _
    $region27: #{tpu_custom_call.1} parent=1 // pred_check_branch
      %55 = sbr.rel (0) target = $region29
    $region28: #{tpu_custom_call.1} parent=1 // pred_region
      %56 = dma.done [#allocation7], 8192
    $region29: #{tpu_custom_call.1} parent=1 // pred_fallthru
      _
    // Predicated region
    $region30: #{tpu_custom_call.1} parent=1 // pred_check
      _
    $region31: #{tpu_custom_call.1} parent=1 // pred_check_branch
      %58 = sbr.rel (0) target = $region33
    $region32: #{tpu_custom_call.1} parent=1 // pred_region
      %59 = dma.done [#allocation7], 1024
    $region33: #{tpu_custom_call.1} parent=1 // pred_fallthru
      _
    %p61 = scmp.eq.s32.totalorder 0, 0
    // Predicated region
    $region34: #{tpu_custom_call.1} parent=1 // pred_check
      %p62 = pneg %p61
    $region35: #{tpu_custom_call.1} parent=1 // pred_check_branch
      %64 = sbr.rel (%p62) target = $region37
    $region36: #{tpu_custom_call.1} parent=1 // pred_region
      %65 = vst [vmem:[#allocation2] sm:$0xff] 0.0
    $region37: #{tpu_custom_call.1} parent=1 // pred_fallthru
      _
    %v66 = vld [vmem:[#allocation2] sm:$0xff]
    %v67 = vld [vmem:[#allocation3] sm:$0xff]
    %v68 = vld [vmem:[#allocation3 + $0x8] sm:$0xff]
    %v69 = vld [vmem:[#allocation3 + $0x10] sm:$0xff]
    %v70 = vld [vmem:[#allocation3 + $0x18] sm:$0xff]
    %v71 = vld [vmem:[#allocation3 + $0x20] sm:$0xff]
    %v72 = vld [vmem:[#allocation3 + $0x28] sm:$0xff]
    %v73 = vld [vmem:[#allocation3 + $0x30] sm:$0xff]
    %v74 = vld [vmem:[#allocation3 + $0x38] sm:$0xff]
    %v75 = vpack.c.bf16 %v67, %v67
    %v76 = vpack.c.bf16 %v68, %v68
    %v77 = vpack.c.bf16 %v69, %v69
    %v78 = vpack.c.bf16 %v70, %v70
    %v79 = vpack.c.bf16 %v71, %v71
    %v80 = vpack.c.bf16 %v72, %v72
    %v81 = vpack.c.bf16 %v73, %v73
    %v82 = vpack.c.bf16 %v74, %v74
    %v83 = vld [vmem:[#allocation6] sm:$0xf]
    %v84 = vld [vmem:[#allocation6 + $0x4] sm:$0xf]
    %v85 = vld [vmem:[#allocation6 + $0x8] sm:$0xf]
    %v86 = vld [vmem:[#allocation6 + $0xc] sm:$0xf]
    %v87 = vld [vmem:[#allocation6 + $0x10] sm:$0xf]
    %v88 = vld [vmem:[#allocation6 + $0x14] sm:$0xf]
    %v89 = vld [vmem:[#allocation6 + $0x18] sm:$0xf]
    %v90 = vld [vmem:[#allocation6 + $0x1c] sm:$0xf]
    %v91 = vld [vmem:[#allocation6 + $0x20] sm:$0xf]
    %v92 = vld [vmem:[#allocation6 + $0x24] sm:$0xf]
    %v93 = vld [vmem:[#allocation6 + $0x28] sm:$0xf]
    %v94 = vld [vmem:[#allocation6 + $0x2c] sm:$0xf]
    %v95 = vld [vmem:[#allocation6 + $0x30] sm:$0xf]
    %v96 = vld [vmem:[#allocation6 + $0x34] sm:$0xf]
    %v97 = vld [vmem:[#allocation6 + $0x38] sm:$0xf]
    %v98 = vld [vmem:[#allocation6 + $0x3c] sm:$0xf]
    %v99 = vld [vmem:[#allocation6 + $0x40] sm:$0xf]
    %v100 = vld [vmem:[#allocation6 + $0x44] sm:$0xf]
    %v101 = vld [vmem:[#allocation6 + $0x48] sm:$0xf]
    %v102 = vld [vmem:[#allocation6 + $0x4c] sm:$0xf]
    %v103 = vld [vmem:[#allocation6 + $0x50] sm:$0xf]
    %v104 = vld [vmem:[#allocation6 + $0x54] sm:$0xf]
    %v105 = vld [vmem:[#allocation6 + $0x58] sm:$0xf]
    %v106 = vld [vmem:[#allocation6 + $0x5c] sm:$0xf]
    %v107 = vld [vmem:[#allocation6 + $0x60] sm:$0xf]
    %v108 = vld [vmem:[#allocation6 + $0x64] sm:$0xf]
    %v109 = vld [vmem:[#allocation6 + $0x68] sm:$0xf]
    %v110 = vld [vmem:[#allocation6 + $0x6c] sm:$0xf]
    %v111 = vld [vmem:[#allocation6 + $0x70] sm:$0xf]
    %v112 = vld [vmem:[#allocation6 + $0x74] sm:$0xf]
    %v113 = vld [vmem:[#allocation6 + $0x78] sm:$0xf]
    %v114 = vld [vmem:[#allocation6 + $0x7c] sm:$0xf]
    %v115 = vld [vmem:[#allocation6 + $0x80] sm:$0xf]
    %v116 = vld [vmem:[#allocation6 + $0x84] sm:$0xf]
    %v117 = vld [vmem:[#allocation6 + $0x88] sm:$0xf]
    %v118 = vld [vmem:[#allocation6 + $0x8c] sm:$0xf]
    %v119 = vld [vmem:[#allocation6 + $0x90] sm:$0xf]
    %v120 = vld [vmem:[#allocation6 + $0x94] sm:$0xf]
    %v121 = vld [vmem:[#allocation6 + $0x98] sm:$0xf]
    %v122 = vld [vmem:[#allocation6 + $0x9c] sm:$0xf]
    %v123 = vld [vmem:[#allocation6 + $0xa0] sm:$0xf]
    %v124 = vld [vmem:[#allocation6 + $0xa4] sm:$0xf]
    %v125 = vld [vmem:[#allocation6 + $0xa8] sm:$0xf]
    %v126 = vld [vmem:[#allocation6 + $0xac] sm:$0xf]
    %v127 = vld [vmem:[#allocation6 + $0xb0] sm:$0xf]
    %v128 = vld [vmem:[#allocation6 + $0xb4] sm:$0xf]
    %v129 = vld [vmem:[#allocation6 + $0xb8] sm:$0xf]
    %v130 = vld [vmem:[#allocation6 + $0xbc] sm:$0xf]
    %v131 = vld [vmem:[#allocation6 + $0xc0] sm:$0xf]
    %v132 = vld [vmem:[#allocation6 + $0xc4] sm:$0xf]
    %v133 = vld [vmem:[#allocation6 + $0xc8] sm:$0xf]
    %v134 = vld [vmem:[#allocation6 + $0xcc] sm:$0xf]
    %v135 = vld [vmem:[#allocation6 + $0xd0] sm:$0xf]
    %v136 = vld [vmem:[#allocation6 + $0xd4] sm:$0xf]
    %v137 = vld [vmem:[#allocation6 + $0xd8] sm:$0xf]
    %v138 = vld [vmem:[#allocation6 + $0xdc] sm:$0xf]
    %v139 = vld [vmem:[#allocation6 + $0xe0] sm:$0xf]
    %v140 = vld [vmem:[#allocation6 + $0xe4] sm:$0xf]
    %v141 = vld [vmem:[#allocation6 + $0xe8] sm:$0xf]
    %v142 = vld [vmem:[#allocation6 + $0xec] sm:$0xf]
    %v143 = vld [vmem:[#allocation6 + $0xf0] sm:$0xf]
    %v144 = vld [vmem:[#allocation6 + $0xf4] sm:$0xf]
    %v145 = vld [vmem:[#allocation6 + $0xf8] sm:$0xf]
    %v146 = vld [vmem:[#allocation6 + $0xfc] sm:$0xf]
    %v147 = vld [vmem:[#allocation6 + $0x100] sm:$0xf]
    %v148 = vld [vmem:[#allocation6 + $0x104] sm:$0xf]
    %v149 = vld [vmem:[#allocation6 + $0x108] sm:$0xf]
    %v150 = vld [vmem:[#allocation6 + $0x10c] sm:$0xf]
    %v151 = vld [vmem:[#allocation6 + $0x110] sm:$0xf]
    %v152 = vld [vmem:[#allocation6 + $0x114] sm:$0xf]
    %v153 = vld [vmem:[#allocation6 + $0x118] sm:$0xf]
    %v154 = vld [vmem:[#allocation6 + $0x11c] sm:$0xf]
    %v155 = vld [vmem:[#allocation6 + $0x120] sm:$0xf]
    %v156 = vld [vmem:[#allocation6 + $0x124] sm:$0xf]
    %v157 = vld [vmem:[#allocation6 + $0x128] sm:$0xf]
    %v158 = vld [vmem:[#allocation6 + $0x12c] sm:$0xf]
    %v159 = vld [vmem:[#allocation6 + $0x130] sm:$0xf]
    %v160 = vld [vmem:[#allocation6 + $0x134] sm:$0xf]
    %v161 = vld [vmem:[#allocation6 + $0x138] sm:$0xf]
    %v162 = vld [vmem:[#allocation6 + $0x13c] sm:$0xf]
    %v163 = vld [vmem:[#allocation6 + $0x140] sm:$0xf]
    %v164 = vld [vmem:[#allocation6 + $0x144] sm:$0xf]
    %v165 = vld [vmem:[#allocation6 + $0x148] sm:$0xf]
    %v166 = vld [vmem:[#allocation6 + $0x14c] sm:$0xf]
    %v167 = vld [vmem:[#allocation6 + $0x150] sm:$0xf]
    %v168 = vld [vmem:[#allocation6 + $0x154] sm:$0xf]
    %v169 = vld [vmem:[#allocation6 + $0x158] sm:$0xf]
    %v170 = vld [vmem:[#allocation6 + $0x15c] sm:$0xf]
    %v171 = vld [vmem:[#allocation6 + $0x160] sm:$0xf]
    %v172 = vld [vmem:[#allocation6 + $0x164] sm:$0xf]
    %v173 = vld [vmem:[#allocation6 + $0x168] sm:$0xf]
    %v174 = vld [vmem:[#allocation6 + $0x16c] sm:$0xf]
    %v175 = vld [vmem:[#allocation6 + $0x170] sm:$0xf]
    %v176 = vld [vmem:[#allocation6 + $0x174] sm:$0xf]
    %v177 = vld [vmem:[#allocation6 + $0x178] sm:$0xf]
    %v178 = vld [vmem:[#allocation6 + $0x17c] sm:$0xf]
    %v179 = vld [vmem:[#allocation6 + $0x180] sm:$0xf]
    %v180 = vld [vmem:[#allocation6 + $0x184] sm:$0xf]
    %v181 = vld [vmem:[#allocation6 + $0x188] sm:$0xf]
    %v182 = vld [vmem:[#allocation6 + $0x18c] sm:$0xf]
    %v183 = vld [vmem:[#allocation6 + $0x190] sm:$0xf]
    %v184 = vld [vmem:[#allocation6 + $0x194] sm:$0xf]
    %v185 = vld [vmem:[#allocation6 + $0x198] sm:$0xf]
    %v186 = vld [vmem:[#allocation6 + $0x19c] sm:$0xf]
    %v187 = vld [vmem:[#allocation6 + $0x1a0] sm:$0xf]
    %v188 = vld [vmem:[#allocation6 + $0x1a4] sm:$0xf]
    %v189 = vld [vmem:[#allocation6 + $0x1a8] sm:$0xf]
    %v190 = vld [vmem:[#allocation6 + $0x1ac] sm:$0xf]
    %v191 = vld [vmem:[#allocation6 + $0x1b0] sm:$0xf]
    %v192 = vld [vmem:[#allocation6 + $0x1b4] sm:$0xf]
    %v193 = vld [vmem:[#allocation6 + $0x1b8] sm:$0xf]
    %v194 = vld [vmem:[#allocation6 + $0x1bc] sm:$0xf]
    %v195 = vld [vmem:[#allocation6 + $0x1c0] sm:$0xf]
    %v196 = vld [vmem:[#allocation6 + $0x1c4] sm:$0xf]
    %v197 = vld [vmem:[#allocation6 + $0x1c8] sm:$0xf]
    %v198 = vld [vmem:[#allocation6 + $0x1cc] sm:$0xf]
    %v199 = vld [vmem:[#allocation6 + $0x1d0] sm:$0xf]
    %v200 = vld [vmem:[#allocation6 + $0x1d4] sm:$0xf]
    %v201 = vld [vmem:[#allocation6 + $0x1d8] sm:$0xf]
    %v202 = vld [vmem:[#allocation6 + $0x1dc] sm:$0xf]
    %v203 = vld [vmem:[#allocation6 + $0x1e0] sm:$0xf]
    %v204 = vld [vmem:[#allocation6 + $0x1e4] sm:$0xf]
    %v205 = vld [vmem:[#allocation6 + $0x1e8] sm:$0xf]
    %v206 = vld [vmem:[#allocation6 + $0x1ec] sm:$0xf]
    %v207 = vld [vmem:[#allocation6 + $0x1f0] sm:$0xf]
    %v208 = vld [vmem:[#allocation6 + $0x1f4] sm:$0xf]
    %v209 = vld [vmem:[#allocation6 + $0x1f8] sm:$0xf]
    %v210 = vld [vmem:[#allocation6 + $0x1fc] sm:$0xf]
    %v339 = vunpack.c.l.b16 %v83
    %v340 = vunpack.c.l.b16 %v84
    %v341 = vunpack.c.l.b16 %v85
    %v342 = vunpack.c.l.b16 %v86
    %v343 = vunpack.c.l.b16 %v87
    %v344 = vunpack.c.l.b16 %v88
    %v345 = vunpack.c.l.b16 %v89
    %v346 = vunpack.c.l.b16 %v90
    %v347 = vunpack.c.l.b16 %v91
    %v348 = vunpack.c.l.b16 %v92
    %v349 = vunpack.c.l.b16 %v93
    %v350 = vunpack.c.l.b16 %v94
    %v351 = vunpack.c.l.b16 %v95
    %v352 = vunpack.c.l.b16 %v96
    %v353 = vunpack.c.l.b16 %v97
    %v354 = vunpack.c.l.b16 %v98
    %v355 = vunpack.c.l.b16 %v99
    %v356 = vunpack.c.l.b16 %v100
    %v357 = vunpack.c.l.b16 %v101
    %v358 = vunpack.c.l.b16 %v102
    %v359 = vunpack.c.l.b16 %v103
    %v360 = vunpack.c.l.b16 %v104
    %v361 = vunpack.c.l.b16 %v105
    %v362 = vunpack.c.l.b16 %v106
    %v363 = vunpack.c.l.b16 %v107
    %v364 = vunpack.c.l.b16 %v108
    %v365 = vunpack.c.l.b16 %v109
    %v366 = vunpack.c.l.b16 %v110
    %v367 = vunpack.c.l.b16 %v111
    %v368 = vunpack.c.l.b16 %v112
    %v369 = vunpack.c.l.b16 %v113
    %v370 = vunpack.c.l.b16 %v114
    %v371 = vunpack.c.l.b16 %v115
    %v372 = vunpack.c.l.b16 %v116
    %v373 = vunpack.c.l.b16 %v117
    %v374 = vunpack.c.l.b16 %v118
    %v375 = vunpack.c.l.b16 %v119
    %v376 = vunpack.c.l.b16 %v120
    %v377 = vunpack.c.l.b16 %v121
    %v378 = vunpack.c.l.b16 %v122
    %v379 = vunpack.c.l.b16 %v123
    %v380 = vunpack.c.l.b16 %v124
    %v381 = vunpack.c.l.b16 %v125
    %v382 = vunpack.c.l.b16 %v126
    %v383 = vunpack.c.l.b16 %v127
    %v384 = vunpack.c.l.b16 %v128
    %v385 = vunpack.c.l.b16 %v129
    %v386 = vunpack.c.l.b16 %v130
    %v387 = vunpack.c.l.b16 %v131
    %v388 = vunpack.c.l.b16 %v132
    %v389 = vunpack.c.l.b16 %v133
    %v390 = vunpack.c.l.b16 %v134
    %v391 = vunpack.c.l.b16 %v135
    %v392 = vunpack.c.l.b16 %v136
    %v393 = vunpack.c.l.b16 %v137
    %v394 = vunpack.c.l.b16 %v138
    %v395 = vunpack.c.l.b16 %v139
    %v396 = vunpack.c.l.b16 %v140
    %v397 = vunpack.c.l.b16 %v141
    %v398 = vunpack.c.l.b16 %v142
    %v399 = vunpack.c.l.b16 %v143
    %v400 = vunpack.c.l.b16 %v144
    %v401 = vunpack.c.l.b16 %v145
    %v402 = vunpack.c.l.b16 %v146
    %v403 = vunpack.c.l.b16 %v147
    %v404 = vunpack.c.l.b16 %v148
    %v405 = vunpack.c.l.b16 %v149
    %v406 = vunpack.c.l.b16 %v150
    %v407 = vunpack.c.l.b16 %v151
    %v408 = vunpack.c.l.b16 %v152
    %v409 = vunpack.c.l.b16 %v153
    %v410 = vunpack.c.l.b16 %v154
    %v411 = vunpack.c.l.b16 %v155
    %v412 = vunpack.c.l.b16 %v156
    %v413 = vunpack.c.l.b16 %v157
    %v414 = vunpack.c.l.b16 %v158
    %v415 = vunpack.c.l.b16 %v159
    %v416 = vunpack.c.l.b16 %v160
    %v417 = vunpack.c.l.b16 %v161
    %v418 = vunpack.c.l.b16 %v162
    %v419 = vunpack.c.l.b16 %v163
    %v420 = vunpack.c.l.b16 %v164
    %v421 = vunpack.c.l.b16 %v165
    %v422 = vunpack.c.l.b16 %v166
    %v423 = vunpack.c.l.b16 %v167
    %v424 = vunpack.c.l.b16 %v168
    %v425 = vunpack.c.l.b16 %v169
    %v426 = vunpack.c.l.b16 %v170
    %v427 = vunpack.c.l.b16 %v171
    %v428 = vunpack.c.l.b16 %v172
    %v429 = vunpack.c.l.b16 %v173
    %v430 = vunpack.c.l.b16 %v174
    %v431 = vunpack.c.l.b16 %v175
    %v432 = vunpack.c.l.b16 %v176
    %v433 = vunpack.c.l.b16 %v177
    %v434 = vunpack.c.l.b16 %v178
    %v435 = vunpack.c.l.b16 %v179
    %v436 = vunpack.c.l.b16 %v180
    %v437 = vunpack.c.l.b16 %v181
    %v438 = vunpack.c.l.b16 %v182
    %v439 = vunpack.c.l.b16 %v183
    %v440 = vunpack.c.l.b16 %v184
    %v441 = vunpack.c.l.b16 %v185
    %v442 = vunpack.c.l.b16 %v186
    %v443 = vunpack.c.l.b16 %v187
    %v444 = vunpack.c.l.b16 %v188
    %v445 = vunpack.c.l.b16 %v189
    %v446 = vunpack.c.l.b16 %v190
    %v447 = vunpack.c.l.b16 %v191
    %v448 = vunpack.c.l.b16 %v192
    %v449 = vunpack.c.l.b16 %v193
    %v450 = vunpack.c.l.b16 %v194
    %v451 = vunpack.c.l.b16 %v195
    %v452 = vunpack.c.l.b16 %v196
    %v453 = vunpack.c.l.b16 %v197
    %v454 = vunpack.c.l.b16 %v198
    %v455 = vunpack.c.l.b16 %v199
    %v456 = vunpack.c.l.b16 %v200
    %v457 = vunpack.c.l.b16 %v201
    %v458 = vunpack.c.l.b16 %v202
    %v459 = vunpack.c.l.b16 %v203
    %v460 = vunpack.c.l.b16 %v204
    %v461 = vunpack.c.l.b16 %v205
    %v462 = vunpack.c.l.b16 %v206
    %v463 = vunpack.c.l.b16 %v207
    %v464 = vunpack.c.l.b16 %v208
    %v465 = vunpack.c.l.b16 %v209
    %v466 = vunpack.c.l.b16 %v210
    %v467 = vpack.c.b16 %v340, %v339
    %v468 = vpack.c.b16 %v342, %v341
    %v469 = vpack.c.b16 %v344, %v343
    %v470 = vpack.c.b16 %v346, %v345
    %v471 = vpack.c.b16 %v348, %v347
    %v472 = vpack.c.b16 %v350, %v349
    %v473 = vpack.c.b16 %v352, %v351
    %v474 = vpack.c.b16 %v354, %v353
    %v475 = vpack.c.b16 %v356, %v355
    %v476 = vpack.c.b16 %v358, %v357
    %v477 = vpack.c.b16 %v360, %v359
    %v478 = vpack.c.b16 %v362, %v361
    %v479 = vpack.c.b16 %v364, %v363
    %v480 = vpack.c.b16 %v366, %v365
    %v481 = vpack.c.b16 %v368, %v367
    %v482 = vpack.c.b16 %v370, %v369
    %v483 = vpack.c.b16 %v372, %v371
    %v484 = vpack.c.b16 %v374, %v373
    %v485 = vpack.c.b16 %v376, %v375
    %v486 = vpack.c.b16 %v378, %v377
    %v487 = vpack.c.b16 %v380, %v379
    %v488 = vpack.c.b16 %v382, %v381
    %v489 = vpack.c.b16 %v384, %v383
    %v490 = vpack.c.b16 %v386, %v385
    %v491 = vpack.c.b16 %v388, %v387
    %v492 = vpack.c.b16 %v390, %v389
    %v493 = vpack.c.b16 %v392, %v391
    %v494 = vpack.c.b16 %v394, %v393
    %v495 = vpack.c.b16 %v396, %v395
    %v496 = vpack.c.b16 %v398, %v397
    %v497 = vpack.c.b16 %v400, %v399
    %v498 = vpack.c.b16 %v402, %v401
    %v499 = vpack.c.b16 %v404, %v403
    %v500 = vpack.c.b16 %v406, %v405
    %v501 = vpack.c.b16 %v408, %v407
    %v502 = vpack.c.b16 %v410, %v409
    %v503 = vpack.c.b16 %v412, %v411
    %v504 = vpack.c.b16 %v414, %v413
    %v505 = vpack.c.b16 %v416, %v415
    %v506 = vpack.c.b16 %v418, %v417
    %v507 = vpack.c.b16 %v420, %v419
    %v508 = vpack.c.b16 %v422, %v421
    %v509 = vpack.c.b16 %v424, %v423
    %v510 = vpack.c.b16 %v426, %v425
    %v511 = vpack.c.b16 %v428, %v427
    %v512 = vpack.c.b16 %v430, %v429
    %v513 = vpack.c.b16 %v432, %v431
    %v514 = vpack.c.b16 %v434, %v433
    %v515 = vpack.c.b16 %v436, %v435
    %v516 = vpack.c.b16 %v438, %v437
    %v517 = vpack.c.b16 %v440, %v439
    %v518 = vpack.c.b16 %v442, %v441
    %v519 = vpack.c.b16 %v444, %v443
    %v520 = vpack.c.b16 %v446, %v445
    %v521 = vpack.c.b16 %v448, %v447
    %v522 = vpack.c.b16 %v450, %v449
    %v523 = vpack.c.b16 %v452, %v451
    %v524 = vpack.c.b16 %v454, %v453
    %v525 = vpack.c.b16 %v456, %v455
    %v526 = vpack.c.b16 %v458, %v457
    %v527 = vpack.c.b16 %v460, %v459
    %v528 = vpack.c.b16 %v462, %v461
    %v529 = vpack.c.b16 %v464, %v463
    %v530 = vpack.c.b16 %v466, %v465
    %595 = vmatprep.subr.bf16.mxu0 0
    %596 = vmatpush1.bf16.msra.mxu0 %v474
    %597 = vmatprep.subr.bf16.mxu0 0
    %598 = vmatpush1.bf16.msra.mxu0 %v473
    %599 = vmatprep.subr.bf16.mxu0 0
    %600 = vmatpush1.bf16.msra.mxu0 %v472
    %601 = vmatprep.subr.bf16.mxu0 0
    %602 = vmatpush1.bf16.msra.mxu0 %v471
    %603 = vmatprep.subr.bf16.mxu0 0
    %604 = vmatpush1.bf16.msra.mxu0 %v470
    %605 = vmatprep.subr.bf16.mxu0 0
    %606 = vmatpush1.bf16.msra.mxu0 %v469
    %607 = vmatprep.subr.bf16.mxu0 0
    %608 = vmatpush1.bf16.msra.mxu0 %v468
    %609 = vmatprep.subr.bf16.mxu0 0
    %610 = vmatpush1.bf16.msra.mxu0 %v467
    %611 = vmatprep.subr.bf16.mxu0 0
    %612 = vmatpush2.bf16.msra.mxu0 %v482
    %613 = vmatprep.subr.bf16.mxu0 0
    %614 = vmatpush2.bf16.msra.mxu0 %v481
    %615 = vmatprep.subr.bf16.mxu0 0
    %616 = vmatpush2.bf16.msra.mxu0 %v480
    %617 = vmatprep.subr.bf16.mxu0 0
    %618 = vmatpush2.bf16.msra.mxu0 %v479
    %619 = vmatprep.subr.bf16.mxu0 0
    %620 = vmatpush2.bf16.msra.mxu0 %v478
    %621 = vmatprep.subr.bf16.mxu0 0
    %622 = vmatpush2.bf16.msra.mxu0 %v477
    %623 = vmatprep.subr.bf16.mxu0 0
    %624 = vmatpush2.bf16.msra.mxu0 %v476
    %625 = vmatprep.subr.bf16.mxu0 0
    %626 = vmatpush2.bf16.msra.mxu0 %v475
    %627 = vmatprep.mubr.bf16.mxu0 %v76
    %628 = vmatmul.mubr.bf16.gmra.mxu0 %v75
    %v629 = vpop.f32.mrf.mxu0
    %v630 = vadd.f32 0.0, %v629
    %v631 = vpop.f32.mrf.mxu0
    %v632 = vpop.f32.mrf.mxu0
    %v633 = vpop.f32.mrf.mxu0
    %634 = vdwg.mxu0
    %635 = vmatprep.subr.bf16.mxu0 0
    %636 = vmatpush1.bf16.msra.mxu0 %v490
    %637 = vmatprep.subr.bf16.mxu0 0
    %638 = vmatpush1.bf16.msra.mxu0 %v489
    %639 = vmatprep.subr.bf16.mxu0 0
    %640 = vmatpush1.bf16.msra.mxu0 %v488
    %641 = vmatprep.subr.bf16.mxu0 0
    %642 = vmatpush1.bf16.msra.mxu0 %v487
    %643 = vmatprep.subr.bf16.mxu0 0
    %644 = vmatpush1.bf16.msra.mxu0 %v486
    %645 = vmatprep.subr.bf16.mxu0 0
    %646 = vmatpush1.bf16.msra.mxu0 %v485
    %647 = vmatprep.subr.bf16.mxu0 0
    %648 = vmatpush1.bf16.msra.mxu0 %v484
    %649 = vmatprep.subr.bf16.mxu0 0
    %650 = vmatpush1.bf16.msra.mxu0 %v483
    %651 = vmatprep.subr.bf16.mxu0 0
    %652 = vmatpush2.bf16.msra.mxu0 %v498
    %653 = vmatprep.subr.bf16.mxu0 0
    %654 = vmatpush2.bf16.msra.mxu0 %v497
    %655 = vmatprep.subr.bf16.mxu0 0
    %656 = vmatpush2.bf16.msra.mxu0 %v496
    %657 = vmatprep.subr.bf16.mxu0 0
    %658 = vmatpush2.bf16.msra.mxu0 %v495
    %659 = vmatprep.subr.bf16.mxu0 0
    %660 = vmatpush2.bf16.msra.mxu0 %v494
    %661 = vmatprep.subr.bf16.mxu0 0
    %662 = vmatpush2.bf16.msra.mxu0 %v493
    %663 = vmatprep.subr.bf16.mxu0 0
    %664 = vmatpush2.bf16.msra.mxu0 %v492
    %665 = vmatprep.subr.bf16.mxu0 0
    %666 = vmatpush2.bf16.msra.mxu0 %v491
    %667 = vmatprep.mubr.bf16.mxu0 %v78
    %668 = vmatmul.mubr.bf16.gmra.mxu0 %v77
    %v669 = vpop.f32.mrf.mxu0
    %v670 = vadd.f32 %v630, %v669
    %v671 = vpop.f32.mrf.mxu0
    %v672 = vpop.f32.mrf.mxu0
    %v673 = vpop.f32.mrf.mxu0
    %674 = vdwg.mxu0
    %675 = vmatprep.subr.bf16.mxu0 0
    %676 = vmatpush1.bf16.msra.mxu0 %v506
    %677 = vmatprep.subr.bf16.mxu0 0
    %678 = vmatpush1.bf16.msra.mxu0 %v505
    %679 = vmatprep.subr.bf16.mxu0 0
    %680 = vmatpush1.bf16.msra.mxu0 %v504
    %681 = vmatprep.subr.bf16.mxu0 0
    %682 = vmatpush1.bf16.msra.mxu0 %v503
    %683 = vmatprep.subr.bf16.mxu0 0
    %684 = vmatpush1.bf16.msra.mxu0 %v502
    %685 = vmatprep.subr.bf16.mxu0 0
    %686 = vmatpush1.bf16.msra.mxu0 %v501
    %687 = vmatprep.subr.bf16.mxu0 0
    %688 = vmatpush1.bf16.msra.mxu0 %v500
    %689 = vmatprep.subr.bf16.mxu0 0
    %690 = vmatpush1.bf16.msra.mxu0 %v499
    %691 = vmatprep.subr.bf16.mxu0 0
    %692 = vmatpush2.bf16.msra.mxu0 %v514
    %693 = vmatprep.subr.bf16.mxu0 0
    %694 = vmatpush2.bf16.msra.mxu0 %v513
    %695 = vmatprep.subr.bf16.mxu0 0
    %696 = vmatpush2.bf16.msra.mxu0 %v512
    %697 = vmatprep.subr.bf16.mxu0 0
    %698 = vmatpush2.bf16.msra.mxu0 %v511
    %699 = vmatprep.subr.bf16.mxu0 0
    %700 = vmatpush2.bf16.msra.mxu0 %v510
    %701 = vmatprep.subr.bf16.mxu0 0
    %702 = vmatpush2.bf16.msra.mxu0 %v509
    %703 = vmatprep.subr.bf16.mxu0 0
    %704 = vmatpush2.bf16.msra.mxu0 %v508
    %705 = vmatprep.subr.bf16.mxu0 0
    %706 = vmatpush2.bf16.msra.mxu0 %v507
    %707 = vmatprep.mubr.bf16.mxu0 %v80
    %708 = vmatmul.mubr.bf16.gmra.mxu0 %v79
    %v709 = vpop.f32.mrf.mxu0
    %v710 = vadd.f32 %v670, %v709
    %v711 = vpop.f32.mrf.mxu0
    %v712 = vpop.f32.mrf.mxu0
    %v713 = vpop.f32.mrf.mxu0
    %714 = vdwg.mxu0
    %715 = vmatprep.subr.bf16.mxu0 0
    %716 = vmatpush1.bf16.msra.mxu0 %v522
    %717 = vmatprep.subr.bf16.mxu0 0
    %718 = vmatpush1.bf16.msra.mxu0 %v521
    %719 = vmatprep.subr.bf16.mxu0 0
    %720 = vmatpush1.bf16.msra.mxu0 %v520
    %721 = vmatprep.subr.bf16.mxu0 0
    %722 = vmatpush1.bf16.msra.mxu0 %v519
    %723 = vmatprep.subr.bf16.mxu0 0
    %724 = vmatpush1.bf16.msra.mxu0 %v518
    %725 = vmatprep.subr.bf16.mxu0 0
    %726 = vmatpush1.bf16.msra.mxu0 %v517
    %727 = vmatprep.subr.bf16.mxu0 0
    %728 = vmatpush1.bf16.msra.mxu0 %v516
    %729 = vmatprep.subr.bf16.mxu0 0
    %730 = vmatpush1.bf16.msra.mxu0 %v515
    %731 = vmatprep.subr.bf16.mxu0 0
    %732 = vmatpush2.bf16.msra.mxu0 %v530
    %733 = vmatprep.subr.bf16.mxu0 0
    %734 = vmatpush2.bf16.msra.mxu0 %v529
    %735 = vmatprep.subr.bf16.mxu0 0
    %736 = vmatpush2.bf16.msra.mxu0 %v528
    %737 = vmatprep.subr.bf16.mxu0 0
    %738 = vmatpush2.bf16.msra.mxu0 %v527
    %739 = vmatprep.subr.bf16.mxu0 0
    %740 = vmatpush2.bf16.msra.mxu0 %v526
    %741 = vmatprep.subr.bf16.mxu0 0
    %742 = vmatpush2.bf16.msra.mxu0 %v525
    %743 = vmatprep.subr.bf16.mxu0 0
    %744 = vmatpush2.bf16.msra.mxu0 %v524
    %745 = vmatprep.subr.bf16.mxu0 0
    %746 = vmatpush2.bf16.msra.mxu0 %v523
    %747 = vmatprep.mubr.bf16.mxu0 %v82
    %748 = vmatmul.mubr.bf16.gmra.mxu0 %v81
    %v749 = vpop.f32.mrf.mxu0
    %v750 = vadd.f32 %v710, %v749
    %v751 = vpop.f32.mrf.mxu0
    %v752 = vpop.f32.mrf.mxu0
    %v753 = vpop.f32.mrf.mxu0
    %754 = vdwg.mxu0
    %v755 = vadd.f32 %v66, %v750
    %756 = vst [vmem:[#allocation2] sm:$0xff] %v755
    // Predicated region
    $region38: #{tpu_custom_call.1} parent=1 // pred_check
      %p757 = pneg %p61
    $region39: #{tpu_custom_call.1} parent=1 // pred_check_branch
      %759 = sbr.rel (%p757) target = $region41
    $region40: #{tpu_custom_call.1} parent=1 // pred_region
      %v760 = vld [vmem:[#allocation2] sm:$0xff]
      %v761 = vld [vmem:[%s2] sm:$0x1]
      %v763 = vlaneseq
      %v764 = vshrl.u32 %v763, 7
      %v765 = vsub.s32 0, %v764
      %v766 = vrot.slane %v761, %v765
      %v768 = vadd.f32 %v760, %v766
      %v769 = vmax.f32 %v768, 0.0
      %v770 = vpack.c.bf16 %v769, %v769
      %v771 = vld [vmem:[#allocation8] sm:$0xf]
      %v772 = vld [vmem:[#allocation8 + $0x4] sm:$0xf]
      %v773 = vld [vmem:[#allocation8 + $0x8] sm:$0xf]
      %v774 = vld [vmem:[#allocation8 + $0xc] sm:$0xf]
      %v775 = vld [vmem:[#allocation8 + $0x10] sm:$0xf]
      %v776 = vld [vmem:[#allocation8 + $0x14] sm:$0xf]
      %v777 = vld [vmem:[#allocation8 + $0x18] sm:$0xf]
      %v778 = vld [vmem:[#allocation8 + $0x1c] sm:$0xf]
      %v779 = vld [vmem:[#allocation8 + $0x20] sm:$0xf]
      %v780 = vld [vmem:[#allocation8 + $0x24] sm:$0xf]
      %v781 = vld [vmem:[#allocation8 + $0x28] sm:$0xf]
      %v782 = vld [vmem:[#allocation8 + $0x2c] sm:$0xf]
      %v783 = vld [vmem:[#allocation8 + $0x30] sm:$0xf]
      %v784 = vld [vmem:[#allocation8 + $0x34] sm:$0xf]
      %v785 = vld [vmem:[#allocation8 + $0x38] sm:$0xf]
      %v786 = vld [vmem:[#allocation8 + $0x3c] sm:$0xf]
      %v787 = vld [vmem:[%s4] sm:$0x1]
      %v789 = vlaneseq
      %v790 = vshrl.u32 %v789, 7
      %v791 = vsub.s32 0, %v790
      %v792 = vrot.slane %v787, %v791
      %v810 = vunpack.c.l.b16 %v771
      %v811 = vunpack.c.l.b16 %v772
      %v812 = vunpack.c.l.b16 %v773
      %v813 = vunpack.c.l.b16 %v774
      %v814 = vunpack.c.l.b16 %v775
      %v815 = vunpack.c.l.b16 %v776
      %v816 = vunpack.c.l.b16 %v777
      %v817 = vunpack.c.l.b16 %v778
      %v818 = vunpack.c.l.b16 %v779
      %v819 = vunpack.c.l.b16 %v780
      %v820 = vunpack.c.l.b16 %v781
      %v821 = vunpack.c.l.b16 %v782
      %v822 = vunpack.c.l.b16 %v783
      %v823 = vunpack.c.l.b16 %v784
      %v824 = vunpack.c.l.b16 %v785
      %v825 = vunpack.c.l.b16 %v786
      %v826 = vpack.c.b16 %v811, %v810
      %v827 = vpack.c.b16 %v813, %v812
      %v828 = vpack.c.b16 %v815, %v814
      %v829 = vpack.c.b16 %v817, %v816
      %v830 = vpack.c.b16 %v819, %v818
      %v831 = vpack.c.b16 %v821, %v820
      %v832 = vpack.c.b16 %v823, %v822
      %v833 = vpack.c.b16 %v825, %v824
      %842 = vmatprep.subr.bf16.mxu0 0
      %843 = vmatpush1.bf16.msra.mxu0 %v833
      %844 = vmatprep.subr.bf16.mxu0 0
      %845 = vmatpush1.bf16.msra.mxu0 %v832
      %846 = vmatprep.subr.bf16.mxu0 0
      %847 = vmatpush1.bf16.msra.mxu0 %v831
      %848 = vmatprep.subr.bf16.mxu0 0
      %849 = vmatpush1.bf16.msra.mxu0 %v830
      %850 = vmatprep.subr.bf16.mxu0 0
      %851 = vmatpush1.bf16.msra.mxu0 %v829
      %852 = vmatprep.subr.bf16.mxu0 0
      %853 = vmatpush1.bf16.msra.mxu0 %v828
      %854 = vmatprep.subr.bf16.mxu0 0
      %855 = vmatpush1.bf16.msra.mxu0 %v827
      %856 = vmatprep.subr.bf16.mxu0 0
      %857 = vmatpush1.bf16.msra.mxu0 %v826
      %858 = vmatprep.subr.bf16.mxu0 0
      %859 = vmatpush2.bf16.msra.mxu0 0
      %860 = vmatprep.subr.bf16.mxu0 0
      %861 = vmatpush2.bf16.msra.mxu0 0
      %862 = vmatprep.subr.bf16.mxu0 0
      %863 = vmatpush2.bf16.msra.mxu0 0
      %864 = vmatprep.subr.bf16.mxu0 0
      %865 = vmatpush2.bf16.msra.mxu0 0
      %866 = vmatprep.subr.bf16.mxu0 0
      %867 = vmatpush2.bf16.msra.mxu0 0
      %868 = vmatprep.subr.bf16.mxu0 0
      %869 = vmatpush2.bf16.msra.mxu0 0
      %870 = vmatprep.subr.bf16.mxu0 0
      %871 = vmatpush2.bf16.msra.mxu0 0
      %872 = vmatprep.subr.bf16.mxu0 0
      %873 = vmatpush2.bf16.msra.mxu0 0
      %874 = vmatprep.mubr.bf16.mxu0 0
      %875 = vmatmul.mubr.bf16.gmra.mxu0 %v770
      %v876 = vpop.f32.mrf.mxu0
      %v877 = vadd.f32 %v792, %v876
      %v878 = vpop.f32.mrf.mxu0
      %v879 = vpop.f32.mrf.mxu0
      %v880 = vpop.f32.mrf.mxu0
      %881 = vdwg.mxu0
      %882 = vst [vmem:[#allocation9] sm:$0xff] %v877
    $region41: #{tpu_custom_call.1} parent=1 // pred_fallthru
      _
    // Predicated region
    $region42: #{tpu_custom_call.1} parent=1 // pred_check
      _
    $region43: #{tpu_custom_call.1} parent=1 // pred_check_branch
      %884 = sbr.rel (0) target = $region45
    $region44: #{tpu_custom_call.1} parent=1 // pred_region
      %s886 = ssub.s32 128, 128
      %887 = vsyncadd [#allocation5], %s886
      %s889 = sshll.u32 [#allocation9], 4
      %s890 = int_to_ptr.vmem [resolvable:$true] %s889
      %892 = dma.vmem_to_hbm [thread:$0]  %s890, 128, %s5, [#allocation5]
    $region45: #{tpu_custom_call.1} parent=1 // pred_fallthru
      _
    // Predicated region
    $region46: #{tpu_custom_call.1} parent=1 // pred_check
      _
    $region47: #{tpu_custom_call.1} parent=1 // pred_check_branch
      %894 = sbr.rel (0) target = $region49
    $region48: #{tpu_custom_call.1} parent=1 // pred_region
      %895 = dma.done [#allocation5], 128
    $region49: #{tpu_custom_call.1} parent=1 // pred_fallthru
      _
    %896 = vsyncpa [#allocation4], 1
    %897 = vsyncpa [#allocation7], 1
    %898 = vsyncpa [#allocation5], 1

</llo_original>
